<compile_context>
chip_gen: v7x
topology: tpu7x:2x2x1
jax: 0.10.0
libtpu: 0.0.40
codegen_flags: <defaults>
</compile_context>

<pallas_src>
import jax
import jax.numpy as jnp
from jax.experimental import pallas as pl
from jax.experimental.pallas import tpu as pltpu


def encoder_kernel(x_ref, w1_ref, b1_ref, wmv_ref, bmv_ref, mv_ref):
    # ---- hidden = relu(x @ W1 + b1); x arrives already bf16, f32 accumulation ----
    h = jnp.dot(x_ref[...], w1_ref[...],
                preferred_element_type=jnp.float32) + b1_ref[...]
    h = jnp.maximum(h, 0.0)

    # ---- fused mu/var head: one GEMM into a packed (tile_b, 2*latent) tile ----
    mv_ref[...] = jnp.dot(h.astype(jnp.bfloat16), wmv_ref[...],
                          preferred_element_type=jnp.float32) + bmv_ref[...]


def _choose_batch_tiling(B):
    """Pick (padded batch, batch tile) per chip generation.

    v7x has 2 TensorCores per chip -> even grid, one tile per core.
    v5e/v6e are single-TC -> grid=(1,) (every extra grid step is pure serial
    pipeline overhead for this overhead/DMA-bound kernel).
    """
    kind = ""
    try:
        kind = jax.devices()[0].device_kind.lower()
    except Exception:
        pass
    n_tc = 2 if "v7" in kind else 1

    # Pad B so it splits evenly into n_tc sublane-aligned (multiple-of-8) tiles.
    B_pad = pl.cdiv(B, 8 * n_tc) * 8 * n_tc
    tile_b = B_pad // n_tc
    # For very large batches, cap the per-step tile (amortization vs VMEM),
    # keeping the grid an even multiple of the TC count and tiles 8-aligned.
    while tile_b > 512 and (tile_b // 2) % 8 == 0:
        tile_b //= 2
    return B_pad, tile_b


def encoder_forward(x, params):
    """x: (B, input_dim) f32.  params: bf16 matmul weights, f32 biases.
    Returns (z_mu, z_var), both (B, latent_dim) f32."""
    B, input_dim = x.shape
    hidden_dim = params["w1"].shape[1]
    two_latent = params["wmv"].shape[1]
    latent_dim = two_latent // 2

    B_pad, tile_b = _choose_batch_tiling(B)
    grid = (B_pad // tile_b,)

    # Cast x once at the boundary; pad ragged batches instead of asserting.
    x_bf16 = x.astype(jnp.bfloat16)
    if B_pad != B:
        x_bf16 = jnp.pad(x_bf16, ((0, B_pad - B), (0, 0)))

    flops = 2 * B_pad * (input_dim * hidden_dim + hidden_dim * two_latent)
    bytes_accessed = (
        x_bf16.size * 2                                       # bf16 x stream
        + params["w1"].size * 2 + params["wmv"].size * 2      # bf16 weights (once)
        + params["b1"].size * 4 + params["bmv"].size * 4      # f32 biases
        + B_pad * two_latent * 4                              # packed f32 output
    )

    # VMEM limit from the real footprint (conservative: 2 buffers everywhere)
    # plus headroom for compiler scratch.
    resident_bytes = 2 * (params["w1"].size * 2 + params["wmv"].size * 2
                          + params["b1"].size * 4 + params["bmv"].size * 4)
    stream_bytes = 2 * (tile_b * input_dim * 2 + tile_b * two_latent * 4)
    vmem_bytes = min(2 * (resident_bytes + stream_bytes) + (4 << 20), 32 << 20)

    def build(single_buffer_weights):
        def resident(shape):
            if single_buffer_weights:
                # Weights/biases never change block index -> 1 buffer is enough.
                return pl.BlockSpec(shape, lambda i: (0, 0),
                                    pipeline_mode=pl.Buffered(1))
            return pl.BlockSpec(shape, lambda i: (0, 0))

        return pl.pallas_call(
            encoder_kernel,
            out_shape=jax.ShapeDtypeStruct((B_pad, two_latent), jnp.float32),
            grid=grid,
            in_specs=[
                pl.BlockSpec((tile_b, input_dim), lambda i: (i, 0)),  # x (batch-tiled)
                resident((input_dim, hidden_dim)),                    # W1
                resident((1, hidden_dim)),                            # b1
                resident((hidden_dim, two_latent)),                   # Wmu|Wvar
                resident((1, two_latent)),                            # bmu|bvar
            ],
            out_specs=pl.BlockSpec((tile_b, two_latent), lambda i: (i, 0)),
            compiler_params=pltpu.CompilerParams(
                dimension_semantics=("parallel",),   # shards batch tiles across v7x's 2 TCs
                vmem_limit_bytes=vmem_bytes,
            ),
            cost_estimate=pl.CostEstimate(
                flops=flops, transcendentals=0, bytes_accessed=bytes_accessed),
        )

    args = (x_bf16, params["w1"], params["b1"], params["wmv"], params["bmv"])
    try:
        mv = build(single_buffer_weights=True)(*args)
        jax.block_until_ready(mv)
    except Exception:
        # Fallback if this JAX build rejects Buffered(1) single-buffering.
        mv = build(single_buffer_weights=False)(*args)

    mv = mv[:B]
    # Packed lane-dense output; the mu/var split is a static slice at the
    # consumer (cheapest option vs. two 64-wide masked kernel outputs).
    z_mu = mv[:, :latent_dim]
    z_var = mv[:, latent_dim:]
    return z_mu, z_var


def init_linear(key, fan_in, fan_out):
    """PyTorch-Linear-like init U(-1/sqrt(fan_in), 1/sqrt(fan_in)).
    Weight stored as (fan_in, fan_out); bias as (1, fan_out) for lane broadcast."""
    kw, kb = jax.random.split(key)
    bound = 1.0 / jnp.sqrt(fan_in)
    w = jax.random.uniform(kw, (fan_in, fan_out), jnp.float32, -bound, bound)
    b = jax.random.uniform(kb, (1, fan_out), jnp.float32, -bound, bound)
    return w, b


if __name__ == "__main__":
    # Encoder(input_dim, hidden_dim, latent_dim); shapes kept small and
    # lane/sublane aligned (two_latent = 128 -> lane-dense packed output).
    B, input_dim, hidden_dim, latent_dim = 256, 256, 128, 64

    key = jax.random.PRNGKey(0)
    kx, k1, k2, k3 = jax.random.split(key, 4)

    x = jax.random.uniform(kx, (B, input_dim), jnp.float32)   # MNIST-like pixels in [0,1)

    w1_f32, b1 = init_linear(k1, input_dim, hidden_dim)       # encoder.linear
    wmu_f32, bmu = init_linear(k2, hidden_dim, latent_dim)    # encoder.mu
    wvar_f32, bvar = init_linear(k3, hidden_dim, latent_dim)  # encoder.var

    # Fuse mu/var weights/biases; store matmul weights in bf16 (halves DMA
    # bytes, native MXU dtype); biases stay f32 (added after f32 accumulation).
    wmv_f32 = jnp.concatenate([wmu_f32, wvar_f32], axis=1)    # (hidden, 2*latent)
    bmv = jnp.concatenate([bmu, bvar], axis=1)                # (1, 2*latent)
    params = dict(
        w1=w1_f32.astype(jnp.bfloat16), b1=b1,
        wmv=wmv_f32.astype(jnp.bfloat16), bmv=bmv,
    )

    z_mu, z_var = encoder_forward(x, params)
    jax.block_until_ready((z_mu, z_var))

    # Pure-JAX reference using the same bf16 operands / f32 accumulation.
    x_bf16 = x.astype(jnp.bfloat16)
    h_ref = jnp.maximum(
        jnp.dot(x_bf16, params["w1"], preferred_element_type=jnp.float32) + b1, 0.0)
    mv_ref = jnp.dot(h_ref.astype(jnp.bfloat16), params["wmv"],
                     preferred_element_type=jnp.float32) + bmv
    mu_ref = mv_ref[:, :latent_dim]
    var_ref = mv_ref[:, latent_dim:]

    assert z_mu.shape == (B, latent_dim)
    assert z_var.shape == (B, latent_dim)
    assert jnp.allclose(z_mu, mu_ref, atol=1e-3, rtol=1e-3)
    assert jnp.allclose(z_var, var_ref, atol=1e-3, rtol=1e-3)

    # Sanity check against full-f32 math (bf16 quantization error only).
    h_f32 = jnp.maximum(x @ w1_f32 + b1, 0.0)
    mu_f32 = h_f32 @ wmu_f32 + bmu
    var_f32 = h_f32 @ wvar_f32 + bvar
    assert jnp.allclose(z_mu, mu_f32, atol=5e-2, rtol=5e-2)
    assert jnp.allclose(z_var, var_f32, atol=5e-2, rtol=5e-2)

    print("KERNEL_OK")
</pallas_src>

<mosaic_0001>
module attributes {stable_mosaic.version = 11 : i64} {
  func.func @encoder_kernel(%arg0: i32, %arg1: memref<256x256xbf16, #tpu.memory_space<vmem>>, %arg2: memref<256x128xbf16, #tpu.memory_space<vmem>>, %arg3: memref<1x128xf32, #tpu.memory_space<vmem>>, %arg4: memref<128x128xbf16, #tpu.memory_space<vmem>>, %arg5: memref<1x128xf32, #tpu.memory_space<vmem>>, %arg6: memref<256x128xf32, #tpu.memory_space<vmem>>) attributes {dimension_semantics = [#tpu.dimension_semantics<parallel>], iteration_bounds = array<i64: 1>, scalar_prefetch = 0 : i64, scratch_operands = 0 : i64, tpu.core_type = #tpu.core_type<tc>, window_params = [{transform_indices = @transform_0, window_bounds = array<i64: 256, 256>}, {pipeline_mode = #tpu.pipeline_mode<synchronous>, transform_indices = @transform_1, window_bounds = array<i64: 256, 128>}, {pipeline_mode = #tpu.pipeline_mode<synchronous>, transform_indices = @transform_2, window_bounds = array<i64: 1, 128>}, {pipeline_mode = #tpu.pipeline_mode<synchronous>, transform_indices = @transform_3, window_bounds = array<i64: 128, 128>}, {pipeline_mode = #tpu.pipeline_mode<synchronous>, transform_indices = @transform_4, window_bounds = array<i64: 1, 128>}, {transform_indices = @transform_5, window_bounds = array<i64: 256, 128>}]} {
    %c0 = arith.constant 0 : index
    %c0_0 = arith.constant 0 : index
    %0 = vector.load %arg1[%c0, %c0_0] : memref<256x256xbf16, #tpu.memory_space<vmem>>, vector<256x256xbf16>
    %c0_1 = arith.constant 0 : index
    %c0_2 = arith.constant 0 : index
    %1 = vector.load %arg2[%c0_1, %c0_2] : memref<256x128xbf16, #tpu.memory_space<vmem>>, vector<256x128xbf16>
    %cst = arith.constant dense<0.000000e+00> : vector<256x128xf32>
    %2 = tpu.matmul %0, %1, %cst {dimension_numbers = #tpu.dot_dimension_numbers<[1], [0], [0], [1], [0, 0, 1, 1], [], []>} : vector<256x256xbf16>, vector<256x128xbf16>, vector<256x128xf32> -> vector<256x128xf32>
    %c0_3 = arith.constant 0 : index
    %c0_4 = arith.constant 0 : index
    %3 = vector.load %arg3[%c0_3, %c0_4] : memref<1x128xf32, #tpu.memory_space<vmem>>, vector<1x128xf32>
    %4 = vector.broadcast %3 : vector<1x128xf32> to vector<256x128xf32>
    %5 = arith.addf %2, %4 : vector<256x128xf32>
    %cst_5 = arith.constant 0.000000e+00 : f32
    %6 = vector.broadcast %cst_5 : f32 to vector<256x128xf32>
    %7 = arith.maximumf %5, %6 : vector<256x128xf32>
    %8 = arith.truncf %7 : vector<256x128xf32> to vector<256x128xbf16>
    %c0_6 = arith.constant 0 : index
    %c0_7 = arith.constant 0 : index
    %9 = vector.load %arg4[%c0_6, %c0_7] : memref<128x128xbf16, #tpu.memory_space<vmem>>, vector<128x128xbf16>
    %cst_8 = arith.constant dense<0.000000e+00> : vector<256x128xf32>
    %10 = tpu.matmul %8, %9, %cst_8 {dimension_numbers = #tpu.dot_dimension_numbers<[1], [0], [0], [1], [0, 0, 1, 1], [], []>} : vector<256x128xbf16>, vector<128x128xbf16>, vector<256x128xf32> -> vector<256x128xf32>
    %c0_9 = arith.constant 0 : index
    %c0_10 = arith.constant 0 : index
    %11 = vector.load %arg5[%c0_9, %c0_10] : memref<1x128xf32, #tpu.memory_space<vmem>>, vector<1x128xf32>
    %12 = vector.broadcast %11 : vector<1x128xf32> to vector<256x128xf32>
    %13 = arith.addf %10, %12 : vector<256x128xf32>
    %c0_11 = arith.constant 0 : index
    %c0_12 = arith.constant 0 : index
    %14 = vector.load %arg6[%c0_11, %c0_12] : memref<256x128xf32, #tpu.memory_space<vmem>>, vector<256x128xf32>
    tpu.vector_store %arg6[%c0_11, %c0_12], %13 {strides = array<i32>} : memref<256x128xf32, #tpu.memory_space<vmem>>, vector<256x128xf32>,
    return
  }
  func.func @transform_0(%arg0: i32) -> (i32, i32) {
    %c0_i32 = arith.constant 0 : i32
    %c0_i32_0 = arith.constant 0 : i32
    return %arg0, %c0_i32 : i32, i32
  }
  func.func @transform_1(%arg0: i32) -> (i32, i32) {
    %c0_i32 = arith.constant 0 : i32
    %c0_i32_0 = arith.constant 0 : i32
    %c0_i32_1 = arith.constant 0 : i32
    return %c0_i32, %c0_i32_0 : i32, i32
  }
  func.func @transform_2(%arg0: i32) -> (i32, i32) {
    %c0_i32 = arith.constant 0 : i32
    %c0_i32_0 = arith.constant 0 : i32
    %c0_i32_1 = arith.constant 0 : i32
    return %c0_i32, %c0_i32_0 : i32, i32
  }
  func.func @transform_3(%arg0: i32) -> (i32, i32) {
    %c0_i32 = arith.constant 0 : i32
    %c0_i32_0 = arith.constant 0 : i32
    %c0_i32_1 = arith.constant 0 : i32
    return %c0_i32, %c0_i32_0 : i32, i32
  }
  func.func @transform_4(%arg0: i32) -> (i32, i32) {
    %c0_i32 = arith.constant 0 : i32
    %c0_i32_0 = arith.constant 0 : i32
    %c0_i32_1 = arith.constant 0 : i32
    return %c0_i32, %c0_i32_0 : i32, i32
  }
  func.func @transform_5(%arg0: i32) -> (i32, i32) {
    %c0_i32 = arith.constant 0 : i32
    %c0_i32_0 = arith.constant 0 : i32
    return %arg0, %c0_i32 : i32, i32
  }
}

module attributes {stable_mosaic.version = 11 : i64} {
  func.func @encoder_kernel(%arg0: i32, %arg1: memref<256x256xbf16, #tpu.memory_space<vmem>>, %arg2: memref<256x128xbf16, #tpu.memory_space<vmem>>, %arg3: memref<1x128xf32, #tpu.memory_space<vmem>>, %arg4: memref<128x128xbf16, #tpu.memory_space<vmem>>, %arg5: memref<1x128xf32, #tpu.memory_space<vmem>>, %arg6: memref<256x128xf32, #tpu.memory_space<vmem>>) attributes {dimension_semantics = [#tpu.dimension_semantics<parallel>], iteration_bounds = array<i64: 1>, scalar_prefetch = 0 : i64, scratch_operands = 0 : i64, tpu.core_type = #tpu.core_type<tc>, window_params = [{transform_indices = @transform_0, window_bounds = array<i64: 256, 256>}, {pipeline_mode = #tpu.pipeline_mode<synchronous>, transform_indices = @transform_1, window_bounds = array<i64: 256, 128>}, {pipeline_mode = #tpu.pipeline_mode<synchronous>, transform_indices = @transform_2, window_bounds = array<i64: 1, 128>}, {pipeline_mode = #tpu.pipeline_mode<synchronous>, transform_indices = @transform_3, window_bounds = array<i64: 128, 128>}, {pipeline_mode = #tpu.pipeline_mode<synchronous>, transform_indices = @transform_4, window_bounds = array<i64: 1, 128>}, {transform_indices = @transform_5, window_bounds = array<i64: 256, 128>}]} {
    %c0 = arith.constant 0 : index
    %c0_0 = arith.constant 0 : index
    %0 = vector.load %arg1[%c0, %c0_0] : memref<256x256xbf16, #tpu.memory_space<vmem>>, vector<256x256xbf16>
    %c0_1 = arith.constant 0 : index
    %c0_2 = arith.constant 0 : index
    %1 = vector.load %arg2[%c0_1, %c0_2] : memref<256x128xbf16, #tpu.memory_space<vmem>>, vector<256x128xbf16>
    %cst = arith.constant dense<0.000000e+00> : vector<256x128xf32>
    %2 = tpu.matmul %0, %1, %cst {dimension_numbers = #tpu.dot_dimension_numbers<[1], [0], [0], [1], [0, 0, 1, 1], [], []>} : vector<256x256xbf16>, vector<256x128xbf16>, vector<256x128xf32> -> vector<256x128xf32>
    %c0_3 = arith.constant 0 : index
    %c0_4 = arith.constant 0 : index
    %3 = vector.load %arg3[%c0_3, %c0_4] : memref<1x128xf32, #tpu.memory_space<vmem>>, vector<1x128xf32>
    %4 = vector.broadcast %3 : vector<1x128xf32> to vector<256x128xf32>
    %5 = arith.addf %2, %4 : vector<256x128xf32>
    %cst_5 = arith.constant 0.000000e+00 : f32
    %6 = vector.broadcast %cst_5 : f32 to vector<256x128xf32>
    %7 = arith.maximumf %5, %6 : vector<256x128xf32>
    %8 = arith.truncf %7 : vector<256x128xf32> to vector<256x128xbf16>
    %c0_6 = arith.constant 0 : index
    %c0_7 = arith.constant 0 : index
    %9 = vector.load %arg4[%c0_6, %c0_7] : memref<128x128xbf16, #tpu.memory_space<vmem>>, vector<128x128xbf16>
    %cst_8 = arith.constant dense<0.000000e+00> : vector<256x128xf32>
    %10 = tpu.matmul %8, %9, %cst_8 {dimension_numbers = #tpu.dot_dimension_numbers<[1], [0], [0], [1], [0, 0, 1, 1], [], []>} : vector<256x128xbf16>, vector<128x128xbf16>, vector<256x128xf32> -> vector<256x128xf32>
    %c0_9 = arith.constant 0 : index
    %c0_10 = arith.constant 0 : index
    %11 = vector.load %arg5[%c0_9, %c0_10] : memref<1x128xf32, #tpu.memory_space<vmem>>, vector<1x128xf32>
    %12 = vector.broadcast %11 : vector<1x128xf32> to vector<256x128xf32>
    %13 = arith.addf %10, %12 : vector<256x128xf32>
    %c0_11 = arith.constant 0 : index
    %c0_12 = arith.constant 0 : index
    %14 = vector.load %arg6[%c0_11, %c0_12] : memref<256x128xf32, #tpu.memory_space<vmem>>, vector<256x128xf32>
    tpu.vector_store %arg6[%c0_11, %c0_12], %13 {strides = array<i32>} : memref<256x128xf32, #tpu.memory_space<vmem>>, vector<256x128xf32>,
    return
  }
  func.func @transform_0(%arg0: i32) -> (i32, i32) {
    %c0_i32 = arith.constant 0 : i32
    %c0_i32_0 = arith.constant 0 : i32
    return %arg0, %c0_i32 : i32, i32
  }
  func.func @transform_1(%arg0: i32) -> (i32, i32) {
    %c0_i32 = arith.constant 0 : i32
    %c0_i32_0 = arith.constant 0 : i32
    %c0_i32_1 = arith.constant 0 : i32
    return %c0_i32, %c0_i32_0 : i32, i32
  }
  func.func @transform_2(%arg0: i32) -> (i32, i32) {
    %c0_i32 = arith.constant 0 : i32
    %c0_i32_0 = arith.constant 0 : i32
    %c0_i32_1 = arith.constant 0 : i32
    return %c0_i32, %c0_i32_0 : i32, i32
  }
  func.func @transform_3(%arg0: i32) -> (i32, i32) {
    %c0_i32 = arith.constant 0 : i32
    %c0_i32_0 = arith.constant 0 : i32
    %c0_i32_1 = arith.constant 0 : i32
    return %c0_i32, %c0_i32_0 : i32, i32
  }
  func.func @transform_4(%arg0: i32) -> (i32, i32) {
    %c0_i32 = arith.constant 0 : i32
    %c0_i32_0 = arith.constant 0 : i32
    %c0_i32_1 = arith.constant 0 : i32
    return %c0_i32, %c0_i32_0 : i32, i32
  }
  func.func @transform_5(%arg0: i32) -> (i32, i32) {
    %c0_i32 = arith.constant 0 : i32
    %c0_i32_0 = arith.constant 0 : i32
    return %arg0, %c0_i32 : i32, i32
  }
}

</mosaic_0001>

<llo_original>
// kernel: tpu_custom_call.1
$region0: #{tpu_custom_call.1}
  #allocation0 [shape = 'u32[]', space=smem, size = 0x4, offset = 0x4, fixed_abs, tag = 'smem constant byte address 0x4 - core index']
  #allocation1 [shape = 'u32[144,128]{1,0:T(1,128)}', space=vmem, size = 0x12000, scoped, tag = 'internal scratch']
  %s0 = inlined_call_operand.hbm [shape: bf16[256,256], index: 0, kind: input, shape index: {}]
  %s1 = inlined_call_operand.hbm [shape: bf16[256,128], index: 1, kind: input, shape index: {}]
  %s2 = inlined_call_operand.vmem [shape: f32[1,128], index: 2, kind: input, shape index: {}]
  %s3 = inlined_call_operand.hbm [shape: bf16[128,128], index: 3, kind: input, shape index: {}]
  %s4 = inlined_call_operand.vmem [shape: f32[1,128], index: 4, kind: input, shape index: {}]
  %s5 = inlined_call_operand.hbm [shape: f32[256,128], index: 5, kind: output, shape index: {}]
  %s6 = sld [smem:[#allocation0]]
  $region42: #{tpu_custom_call.1} parent=0
    _
  %s8 = ssub.s32 1, %s6
  %s9 = scalar_select 0, %s8, %s6
  $region1: #{tpu_custom_call.1} parent=0
    #allocation2 [shape = 'u8[131072]{0}', space=vmem, size = 0x20000, scoped, tag = 'input window, operand 0, single buffered']
    #allocation3 [shape = 's32[1]{0}', space=sflag, size = 0x4, scoped, tag = 'scoped memory for tpu_custom_call.1']
    #allocation4 [shape = 's32[1]{0}', space=sflag, size = 0x4, scoped, tag = 'scoped memory for tpu_custom_call.1']
    #allocation5 [shape = 'u8[65536]{0}', space=vmem, size = 0x10000, scoped, tag = 'input window, operand 1, single buffered']
    #allocation6 [shape = 's32[1]{0}', space=sflag, size = 0x4, scoped, tag = 'scoped memory for tpu_custom_call.1']
    #allocation7 [shape = 'u8[32768]{0}', space=vmem, size = 0x8000, scoped, tag = 'input window, operand 3, single buffered']
    #allocation8 [shape = 'u8[131072]{0}', space=vmem, size = 0x20000, scoped, tag = 'output window, operand 0, single buffered']
    %10 = vsyncpa [#allocation3], 0
    %11 = vsyncpa [#allocation6], 0
    %12 = vsyncpa [#allocation4], 0
    // Predicated region
    $region2: #{tpu_custom_call.1} parent=1 // pred_check
      _
    $region3: #{tpu_custom_call.1} parent=1 // pred_check_branch
      %14 = sbr.rel (0) target = $region5
    $region4: #{tpu_custom_call.1} parent=1 // pred_region
      %s16 = ssub.s32 4096, 4096
      %17 = vsyncadd [#allocation3], %s16
      %s18 = sshll.u32 [#allocation2], 4
      %s19 = int_to_ptr.vmem [resolvable:$true] %s18
      %24 = dma.hbm_to_vmem [thread:$0]  %s0, 4096, %s19, [#allocation3], 128, 128, 8
    $region5: #{tpu_custom_call.1} parent=1 // pred_fallthru
      _
    // Predicated region
    $region6: #{tpu_custom_call.1} parent=1 // pred_check
      _
    $region7: #{tpu_custom_call.1} parent=1 // pred_check_branch
      %26 = sbr.rel (0) target = $region9
    $region8: #{tpu_custom_call.1} parent=1 // pred_region
      %s28 = ssub.s32 2048, 2048
      %29 = vsyncadd [#allocation6], %s28
      %s30 = sshll.u32 [#allocation5], 4
      %s31 = int_to_ptr.vmem [resolvable:$true] %s30
      %36 = dma.hbm_to_vmem [thread:$0]  %s1, 2048, %s31, [#allocation6], 64, 64, 4
    $region9: #{tpu_custom_call.1} parent=1 // pred_fallthru
      _
    // Predicated region
    $region10: #{tpu_custom_call.1} parent=1 // pred_check
      _
    $region11: #{tpu_custom_call.1} parent=1 // pred_check_branch
      %38 = sbr.rel (0) target = $region13
    $region12: #{tpu_custom_call.1} parent=1 // pred_region
      _
    $region13: #{tpu_custom_call.1} parent=1 // pred_fallthru
      _
    // Predicated region
    $region14: #{tpu_custom_call.1} parent=1 // pred_check
      _
    $region15: #{tpu_custom_call.1} parent=1 // pred_check_branch
      %40 = sbr.rel (0) target = $region17
    $region16: #{tpu_custom_call.1} parent=1 // pred_region
      %s42 = ssub.s32 1024, 1024
      %43 = vsyncadd [#allocation6], %s42
      %s44 = sshll.u32 [#allocation7], 4
      %s45 = int_to_ptr.vmem [resolvable:$true] %s44
      %50 = dma.hbm_to_vmem [thread:$0]  %s3, 1024, %s45, [#allocation6], 64, 64, 4
    $region17: #{tpu_custom_call.1} parent=1 // pred_fallthru
      _
    // Predicated region
    $region18: #{tpu_custom_call.1} parent=1 // pred_check
      _
    $region19: #{tpu_custom_call.1} parent=1 // pred_check_branch
      %52 = sbr.rel (0) target = $region21
    $region20: #{tpu_custom_call.1} parent=1 // pred_region
      _
    $region21: #{tpu_custom_call.1} parent=1 // pred_fallthru
      _
    // Predicated region
    $region22: #{tpu_custom_call.1} parent=1 // pred_check
      _
    $region23: #{tpu_custom_call.1} parent=1 // pred_check_branch
      %54 = sbr.rel (0) target = $region25
    $region24: #{tpu_custom_call.1} parent=1 // pred_region
      %55 = dma.done [#allocation3], 4096
    $region25: #{tpu_custom_call.1} parent=1 // pred_fallthru
      _
    // Predicated region
    $region26: #{tpu_custom_call.1} parent=1 // pred_check
      _
    $region27: #{tpu_custom_call.1} parent=1 // pred_check_branch
      %57 = sbr.rel (0) target = $region29
    $region28: #{tpu_custom_call.1} parent=1 // pred_region
      %58 = dma.done [#allocation6], 2048
    $region29: #{tpu_custom_call.1} parent=1 // pred_fallthru
      _
    // Predicated region
    $region30: #{tpu_custom_call.1} parent=1 // pred_check
      _
    $region31: #{tpu_custom_call.1} parent=1 // pred_check_branch
      %60 = sbr.rel (0) target = $region33
    $region32: #{tpu_custom_call.1} parent=1 // pred_region
      %61 = dma.done [#allocation6], 1024
    $region33: #{tpu_custom_call.1} parent=1 // pred_fallthru
      _
    %v63 = vld [vmem:[#allocation2] sm:$0xff]
    %v64 = vld [vmem:[#allocation2 + $0x8] sm:$0xff]
    %v65 = vld [vmem:[#allocation2 + $0x10] sm:$0xff]
    %v66 = vld [vmem:[#allocation2 + $0x18] sm:$0xff]
    %v67 = vld [vmem:[#allocation2 + $0x20] sm:$0xff]
    %v68 = vld [vmem:[#allocation2 + $0x28] sm:$0xff]
    %v69 = vld [vmem:[#allocation2 + $0x30] sm:$0xff]
    %v70 = vld [vmem:[#allocation2 + $0x38] sm:$0xff]
    %v71 = vld [vmem:[#allocation2 + $0x40] sm:$0xff]
    %v72 = vld [vmem:[#allocation2 + $0x48] sm:$0xff]
    %v73 = vld [vmem:[#allocation2 + $0x50] sm:$0xff]
    %v74 = vld [vmem:[#allocation2 + $0x58] sm:$0xff]
    %v75 = vld [vmem:[#allocation2 + $0x60] sm:$0xff]
    %v76 = vld [vmem:[#allocation2 + $0x68] sm:$0xff]
    %v77 = vld [vmem:[#allocation2 + $0x70] sm:$0xff]
    %v78 = vld [vmem:[#allocation2 + $0x78] sm:$0xff]
    %v79 = vld [vmem:[#allocation2 + $0x80] sm:$0xff]
    %v80 = vld [vmem:[#allocation2 + $0x88] sm:$0xff]
    %v81 = vld [vmem:[#allocation2 + $0x90] sm:$0xff]
    %v82 = vld [vmem:[#allocation2 + $0x98] sm:$0xff]
    %v83 = vld [vmem:[#allocation2 + $0xa0] sm:$0xff]
    %v84 = vld [vmem:[#allocation2 + $0xa8] sm:$0xff]
    %v85 = vld [vmem:[#allocation2 + $0xb0] sm:$0xff]
    %v86 = vld [vmem:[#allocation2 + $0xb8] sm:$0xff]
    %v87 = vld [vmem:[#allocation2 + $0xc0] sm:$0xff]
    %v88 = vld [vmem:[#allocation2 + $0xc8] sm:$0xff]
    %v89 = vld [vmem:[#allocation2 + $0xd0] sm:$0xff]
    %v90 = vld [vmem:[#allocation2 + $0xd8] sm:$0xff]
    %v91 = vld [vmem:[#allocation2 + $0xe0] sm:$0xff]
    %v92 = vld [vmem:[#allocation2 + $0xe8] sm:$0xff]
    %v93 = vld [vmem:[#allocation2 + $0xf0] sm:$0xff]
    %v94 = vld [vmem:[#allocation2 + $0xf8] sm:$0xff]
    %v95 = vld [vmem:[#allocation5] sm:$0xf]
    %v96 = vld [vmem:[#allocation5 + $0x4] sm:$0xf]
    %v97 = vld [vmem:[#allocation5 + $0x8] sm:$0xf]
    %v98 = vld [vmem:[#allocation5 + $0xc] sm:$0xf]
    %v99 = vld [vmem:[#allocation5 + $0x10] sm:$0xf]
    %v100 = vld [vmem:[#allocation5 + $0x14] sm:$0xf]
    %v101 = vld [vmem:[#allocation5 + $0x18] sm:$0xf]
    %v102 = vld [vmem:[#allocation5 + $0x1c] sm:$0xf]
    %v103 = vld [vmem:[#allocation5 + $0x20] sm:$0xf]
    %v104 = vld [vmem:[#allocation5 + $0x24] sm:$0xf]
    %v105 = vld [vmem:[#allocation5 + $0x28] sm:$0xf]
    %v106 = vld [vmem:[#allocation5 + $0x2c] sm:$0xf]
    %v107 = vld [vmem:[#allocation5 + $0x30] sm:$0xf]
    %v108 = vld [vmem:[#allocation5 + $0x34] sm:$0xf]
    %v109 = vld [vmem:[#allocation5 + $0x38] sm:$0xf]
    %v110 = vld [vmem:[#allocation5 + $0x3c] sm:$0xf]
    %v111 = vld [vmem:[#allocation5 + $0x40] sm:$0xf]
    %v112 = vld [vmem:[#allocation5 + $0x44] sm:$0xf]
    %v113 = vld [vmem:[#allocation5 + $0x48] sm:$0xf]
    %v114 = vld [vmem:[#allocation5 + $0x4c] sm:$0xf]
    %v115 = vld [vmem:[#allocation5 + $0x50] sm:$0xf]
    %v116 = vld [vmem:[#allocation5 + $0x54] sm:$0xf]
    %v117 = vld [vmem:[#allocation5 + $0x58] sm:$0xf]
    %v118 = vld [vmem:[#allocation5 + $0x5c] sm:$0xf]
    %v119 = vld [vmem:[#allocation5 + $0x60] sm:$0xf]
    %v120 = vld [vmem:[#allocation5 + $0x64] sm:$0xf]
    %v121 = vld [vmem:[#allocation5 + $0x68] sm:$0xf]
    %v122 = vld [vmem:[#allocation5 + $0x6c] sm:$0xf]
    %v123 = vld [vmem:[#allocation5 + $0x70] sm:$0xf]
    %v124 = vld [vmem:[#allocation5 + $0x74] sm:$0xf]
    %v125 = vld [vmem:[#allocation5 + $0x78] sm:$0xf]
    %v126 = vld [vmem:[#allocation5 + $0x7c] sm:$0xf]
    %v127 = vld [vmem:[%s2] sm:$0x1]
    %v129 = vlaneseq
    %v130 = vshrl.u32 %v129, 7
    %v131 = vsub.s32 0, %v130
    %v132 = vrot.slane %v127, %v131
    %v166 = vunpack.c.l.b16 %v63
    %v167 = vunpack.c.h.b16 %v63
    %v168 = vunpack.c.l.b16 %v64
    %v169 = vunpack.c.h.b16 %v64
    %v170 = vunpack.c.l.b16 %v65
    %v171 = vunpack.c.h.b16 %v65
    %v172 = vunpack.c.l.b16 %v66
    %v173 = vunpack.c.h.b16 %v66
    %v174 = vunpack.c.l.b16 %v67
    %v175 = vunpack.c.h.b16 %v67
    %v176 = vunpack.c.l.b16 %v68
    %v177 = vunpack.c.h.b16 %v68
    %v178 = vunpack.c.l.b16 %v69
    %v179 = vunpack.c.h.b16 %v69
    %v180 = vunpack.c.l.b16 %v70
    %v181 = vunpack.c.h.b16 %v70
    %v182 = vunpack.c.l.b16 %v71
    %v183 = vunpack.c.h.b16 %v71
    %v184 = vunpack.c.l.b16 %v72
    %v185 = vunpack.c.h.b16 %v72
    %v186 = vunpack.c.l.b16 %v73
    %v187 = vunpack.c.h.b16 %v73
    %v188 = vunpack.c.l.b16 %v74
    %v189 = vunpack.c.h.b16 %v74
    %v190 = vunpack.c.l.b16 %v75
    %v191 = vunpack.c.h.b16 %v75
    %v192 = vunpack.c.l.b16 %v76
    %v193 = vunpack.c.h.b16 %v76
    %v194 = vunpack.c.l.b16 %v77
    %v195 = vunpack.c.h.b16 %v77
    %v196 = vunpack.c.l.b16 %v78
    %v197 = vunpack.c.h.b16 %v78
    %v198 = vunpack.c.l.b16 %v79
    %v199 = vunpack.c.h.b16 %v79
    %v200 = vunpack.c.l.b16 %v80
    %v201 = vunpack.c.h.b16 %v80
    %v202 = vunpack.c.l.b16 %v81
    %v203 = vunpack.c.h.b16 %v81
    %v204 = vunpack.c.l.b16 %v82
    %v205 = vunpack.c.h.b16 %v82
    %v206 = vunpack.c.l.b16 %v83
    %v207 = vunpack.c.h.b16 %v83
    %v208 = vunpack.c.l.b16 %v84
    %v209 = vunpack.c.h.b16 %v84
    %v210 = vunpack.c.l.b16 %v85
    %v211 = vunpack.c.h.b16 %v85
    %v212 = vunpack.c.l.b16 %v86
    %v213 = vunpack.c.h.b16 %v86
    %v214 = vunpack.c.l.b16 %v87
    %v215 = vunpack.c.h.b16 %v87
    %v216 = vunpack.c.l.b16 %v88
    %v217 = vunpack.c.h.b16 %v88
    %v218 = vunpack.c.l.b16 %v89
    %v219 = vunpack.c.h.b16 %v89
    %v220 = vunpack.c.l.b16 %v90
    %v221 = vunpack.c.h.b16 %v90
    %v222 = vunpack.c.l.b16 %v91
    %v223 = vunpack.c.h.b16 %v91
    %v224 = vunpack.c.l.b16 %v92
    %v225 = vunpack.c.h.b16 %v92
    %v226 = vunpack.c.l.b16 %v93
    %v227 = vunpack.c.h.b16 %v93
    %v228 = vunpack.c.l.b16 %v94
    %v229 = vunpack.c.h.b16 %v94
    %v230 = vpack.c.b16 %v168, %v166
    %v231 = vpack.c.b16 %v169, %v167
    %v232 = vpack.c.b16 %v172, %v170
    %v233 = vpack.c.b16 %v173, %v171
    %v234 = vpack.c.b16 %v176, %v174
    %v235 = vpack.c.b16 %v177, %v175
    %v236 = vpack.c.b16 %v180, %v178
    %v237 = vpack.c.b16 %v181, %v179
    %v238 = vpack.c.b16 %v184, %v182
    %v239 = vpack.c.b16 %v185, %v183
    %v240 = vpack.c.b16 %v188, %v186
    %v241 = vpack.c.b16 %v189, %v187
    %v242 = vpack.c.b16 %v192, %v190
    %v243 = vpack.c.b16 %v193, %v191
    %v244 = vpack.c.b16 %v196, %v194
    %v245 = vpack.c.b16 %v197, %v195
    %v246 = vpack.c.b16 %v200, %v198
    %v247 = vpack.c.b16 %v201, %v199
    %v248 = vpack.c.b16 %v204, %v202
    %v249 = vpack.c.b16 %v205, %v203
    %v250 = vpack.c.b16 %v208, %v206
    %v251 = vpack.c.b16 %v209, %v207
    %v252 = vpack.c.b16 %v212, %v210
    %v253 = vpack.c.b16 %v213, %v211
    %v254 = vpack.c.b16 %v216, %v214
    %v255 = vpack.c.b16 %v217, %v215
    %v256 = vpack.c.b16 %v220, %v218
    %v257 = vpack.c.b16 %v221, %v219
    %v258 = vpack.c.b16 %v224, %v222
    %v259 = vpack.c.b16 %v225, %v223
    %v260 = vpack.c.b16 %v228, %v226
    %v261 = vpack.c.b16 %v229, %v227
    %v326 = vunpack.c.l.b16 %v95
    %v327 = vunpack.c.l.b16 %v96
    %v328 = vunpack.c.l.b16 %v97
    %v329 = vunpack.c.l.b16 %v98
    %v330 = vunpack.c.l.b16 %v99
    %v331 = vunpack.c.l.b16 %v100
    %v332 = vunpack.c.l.b16 %v101
    %v333 = vunpack.c.l.b16 %v102
    %v334 = vunpack.c.l.b16 %v103
    %v335 = vunpack.c.l.b16 %v104
    %v336 = vunpack.c.l.b16 %v105
    %v337 = vunpack.c.l.b16 %v106
    %v338 = vunpack.c.l.b16 %v107
    %v339 = vunpack.c.l.b16 %v108
    %v340 = vunpack.c.l.b16 %v109
    %v341 = vunpack.c.l.b16 %v110
    %v342 = vunpack.c.l.b16 %v111
    %v343 = vunpack.c.l.b16 %v112
    %v344 = vunpack.c.l.b16 %v113
    %v345 = vunpack.c.l.b16 %v114
    %v346 = vunpack.c.l.b16 %v115
    %v347 = vunpack.c.l.b16 %v116
    %v348 = vunpack.c.l.b16 %v117
    %v349 = vunpack.c.l.b16 %v118
    %v350 = vunpack.c.l.b16 %v119
    %v351 = vunpack.c.l.b16 %v120
    %v352 = vunpack.c.l.b16 %v121
    %v353 = vunpack.c.l.b16 %v122
    %v354 = vunpack.c.l.b16 %v123
    %v355 = vunpack.c.l.b16 %v124
    %v356 = vunpack.c.l.b16 %v125
    %v357 = vunpack.c.l.b16 %v126
    %v358 = vpack.c.b16 %v327, %v326
    %v359 = vpack.c.b16 %v329, %v328
    %v360 = vpack.c.b16 %v331, %v330
    %v361 = vpack.c.b16 %v333, %v332
    %v362 = vpack.c.b16 %v335, %v334
    %v363 = vpack.c.b16 %v337, %v336
    %v364 = vpack.c.b16 %v339, %v338
    %v365 = vpack.c.b16 %v341, %v340
    %v366 = vpack.c.b16 %v343, %v342
    %v367 = vpack.c.b16 %v345, %v344
    %v368 = vpack.c.b16 %v347, %v346
    %v369 = vpack.c.b16 %v349, %v348
    %v370 = vpack.c.b16 %v351, %v350
    %v371 = vpack.c.b16 %v353, %v352
    %v372 = vpack.c.b16 %v355, %v354
    %v373 = vpack.c.b16 %v357, %v356
    %390 = vmatprep.subr.bf16.mxu0 0
    %391 = vmatpush1.bf16.msra.mxu0 %v358
    %392 = vmatprep.subr.bf16.mxu0 0
    %393 = vmatpush1.bf16.msra.mxu0 %v359
    %394 = vmatprep.subr.bf16.mxu0 0
    %395 = vmatpush1.bf16.msra.mxu0 %v360
    %396 = vmatprep.subr.bf16.mxu0 0
    %397 = vmatpush1.bf16.msra.mxu0 %v361
    %398 = vmatprep.subr.bf16.mxu0 0
    %399 = vmatpush1.bf16.msra.mxu0 %v362
    %400 = vmatprep.subr.bf16.mxu0 0
    %401 = vmatpush1.bf16.msra.mxu0 %v363
    %402 = vmatprep.subr.bf16.mxu0 0
    %403 = vmatpush1.bf16.msra.mxu0 %v364
    %404 = vmatprep.subr.bf16.mxu0 0
    %405 = vmatpush1.bf16.msra.mxu0 %v365
    %406 = vmatprep.subr.bf16.mxu0 0
    %407 = vmatpush1.bf16.msra.mxu0 %v366
    %408 = vmatprep.subr.bf16.mxu0 0
    %409 = vmatpush1.bf16.msra.mxu0 %v367
    %410 = vmatprep.subr.bf16.mxu0 0
    %411 = vmatpush1.bf16.msra.mxu0 %v368
    %412 = vmatprep.subr.bf16.mxu0 0
    %413 = vmatpush1.bf16.msra.mxu0 %v369
    %414 = vmatprep.subr.bf16.mxu0 0
    %415 = vmatpush1.bf16.msra.mxu0 %v370
    %416 = vmatprep.subr.bf16.mxu0 0
    %417 = vmatpush1.bf16.msra.mxu0 %v371
    %418 = vmatprep.subr.bf16.mxu0 0
    %419 = vmatpush1.bf16.msra.mxu0 %v372
    %420 = vmatprep.subr.bf16.mxu0 0
    %421 = vmatpush1.bf16.msra.mxu0 %v373
    %422 = vmatprep.mubr.bf16.mxu0 %v231
    %423 = vmatmul.mubr.bf16.gmra.mrb[0].mxu0 %v230
    %v424 = vpop.f32.mrb[0].mxu0
    %v425 = vadd.f32 %v132, %v424
    %v426 = vpop.f32.mrb[0].mxu0
    %v427 = vpop.f32.mrb[0].mxu0
    %v428 = vadd.f32 %v132, %v427
    %v429 = vpop.f32.mrb[0].mxu0
    %430 = vmatprep.mubr.bf16.mxu0 %v233
    %431 = vmatmul.mubr.bf16.gmra.mrb[0].mxu0 %v232
    %v432 = vpop.f32.mrb[0].mxu0
    %v433 = vadd.f32 %v132, %v432
    %v434 = vpop.f32.mrb[0].mxu0
    %v435 = vpop.f32.mrb[0].mxu0
    %v436 = vadd.f32 %v132, %v435
    %v437 = vpop.f32.mrb[0].mxu0
    %438 = vmatprep.mubr.bf16.mxu0 %v235
    %439 = vmatmul.mubr.bf16.gmra.mrb[0].mxu0 %v234
    %v440 = vpop.f32.mrb[0].mxu0
    %v441 = vadd.f32 %v132, %v440
    %v442 = vpop.f32.mrb[0].mxu0
    %v443 = vpop.f32.mrb[0].mxu0
    %v444 = vadd.f32 %v132, %v443
    %v445 = vpop.f32.mrb[0].mxu0
    %446 = vmatprep.mubr.bf16.mxu0 %v237
    %447 = vmatmul.mubr.bf16.gmra.mrb[0].mxu0 %v236
    %v448 = vpop.f32.mrb[0].mxu0
    %v449 = vadd.f32 %v132, %v448
    %v450 = vpop.f32.mrb[0].mxu0
    %v451 = vpop.f32.mrb[0].mxu0
    %v452 = vadd.f32 %v132, %v451
    %v453 = vpop.f32.mrb[0].mxu0
    %454 = vmatprep.mubr.bf16.mxu0 %v239
    %455 = vmatmul.mubr.bf16.gmra.mrb[0].mxu0 %v238
    %v456 = vpop.f32.mrb[0].mxu0
    %v457 = vadd.f32 %v132, %v456
    %v458 = vpop.f32.mrb[0].mxu0
    %v459 = vpop.f32.mrb[0].mxu0
    %v460 = vadd.f32 %v132, %v459
    %v461 = vpop.f32.mrb[0].mxu0
    %462 = vmatprep.mubr.bf16.mxu0 %v241
    %463 = vmatmul.mubr.bf16.gmra.mrb[0].mxu0 %v240
    %v464 = vpop.f32.mrb[0].mxu0
    %v465 = vadd.f32 %v132, %v464
    %v466 = vpop.f32.mrb[0].mxu0
    %v467 = vpop.f32.mrb[0].mxu0
    %v468 = vadd.f32 %v132, %v467
    %v469 = vpop.f32.mrb[0].mxu0
    %470 = vmatprep.mubr.bf16.mxu0 %v243
    %471 = vmatmul.mubr.bf16.gmra.mrb[0].mxu0 %v242
    %v472 = vpop.f32.mrb[0].mxu0
    %v473 = vadd.f32 %v132, %v472
    %v474 = vpop.f32.mrb[0].mxu0
    %v475 = vpop.f32.mrb[0].mxu0
    %v476 = vadd.f32 %v132, %v475
    %v477 = vpop.f32.mrb[0].mxu0
    %478 = vmatprep.mubr.bf16.mxu0 %v245
    %479 = vmatmul.mubr.bf16.gmra.mrb[0].mxu0 %v244
    %v480 = vpop.f32.mrb[0].mxu0
    %v481 = vadd.f32 %v132, %v480
    %v482 = vpop.f32.mrb[0].mxu0
    %v483 = vpop.f32.mrb[0].mxu0
    %v484 = vadd.f32 %v132, %v483
    %v485 = vpop.f32.mrb[0].mxu0
    %486 = vmatprep.mubr.bf16.mxu0 %v247
    %487 = vmatmul.mubr.bf16.gmra.mrb[0].mxu0 %v246
    %v488 = vpop.f32.mrb[0].mxu0
    %v489 = vadd.f32 %v132, %v488
    %v490 = vpop.f32.mrb[0].mxu0
    %v491 = vpop.f32.mrb[0].mxu0
    %v492 = vadd.f32 %v132, %v491
    %v493 = vpop.f32.mrb[0].mxu0
    %494 = vmatprep.mubr.bf16.mxu0 %v249
    %495 = vmatmul.mubr.bf16.gmra.mrb[0].mxu0 %v248
    %v496 = vpop.f32.mrb[0].mxu0
    %v497 = vadd.f32 %v132, %v496
    %v498 = vpop.f32.mrb[0].mxu0
    %v499 = vpop.f32.mrb[0].mxu0
    %v500 = vadd.f32 %v132, %v499
    %v501 = vpop.f32.mrb[0].mxu0
    %502 = vmatprep.mubr.bf16.mxu0 %v251
    %503 = vmatmul.mubr.bf16.gmra.mrb[0].mxu0 %v250
    %v504 = vpop.f32.mrb[0].mxu0
    %v505 = vadd.f32 %v132, %v504
    %v506 = vpop.f32.mrb[0].mxu0
    %v507 = vpop.f32.mrb[0].mxu0
    %v508 = vadd.f32 %v132, %v507
    %v509 = vpop.f32.mrb[0].mxu0
    %510 = vmatprep.mubr.bf16.mxu0 %v253
    %511 = vmatmul.mubr.bf16.gmra.mrb[0].mxu0 %v252
    %v512 = vpop.f32.mrb[0].mxu0
    %v513 = vadd.f32 %v132, %v512
    %v514 = vpop.f32.mrb[0].mxu0
    %v515 = vpop.f32.mrb[0].mxu0
    %v516 = vadd.f32 %v132, %v515
    %v517 = vpop.f32.mrb[0].mxu0
    %518 = vmatprep.mubr.bf16.mxu0 %v255
    %519 = vmatmul.mubr.bf16.gmra.mrb[0].mxu0 %v254
    %v520 = vpop.f32.mrb[0].mxu0
    %v521 = vadd.f32 %v132, %v520
    %v522 = vpop.f32.mrb[0].mxu0
    %v523 = vpop.f32.mrb[0].mxu0
    %v524 = vadd.f32 %v132, %v523
    %v525 = vpop.f32.mrb[0].mxu0
    %526 = vmatprep.mubr.bf16.mxu0 %v257
    %527 = vmatmul.mubr.bf16.gmra.mrb[0].mxu0 %v256
    %v528 = vpop.f32.mrb[0].mxu0
    %v529 = vadd.f32 %v132, %v528
    %v530 = vpop.f32.mrb[0].mxu0
    %v531 = vpop.f32.mrb[0].mxu0
    %v532 = vadd.f32 %v132, %v531
    %v533 = vpop.f32.mrb[0].mxu0
    %534 = vmatprep.mubr.bf16.mxu0 %v259
    %535 = vmatmul.mubr.bf16.gmra.mrb[0].mxu0 %v258
    %v536 = vpop.f32.mrb[0].mxu0
    %v537 = vadd.f32 %v132, %v536
    %v538 = vpop.f32.mrb[0].mxu0
    %v539 = vpop.f32.mrb[0].mxu0
    %v540 = vadd.f32 %v132, %v539
    %v541 = vpop.f32.mrb[0].mxu0
    %542 = vmatprep.mubr.bf16.mxu0 %v261
    %543 = vmatmul.mubr.bf16.gmra.mrb[0].mxu0 %v260
    %v544 = vpop.f32.mrb[0].mxu0
    %v545 = vadd.f32 %v132, %v544
    %v546 = vpop.f32.mrb[0].mxu0
    %v547 = vpop.f32.mrb[0].mxu0
    %v548 = vadd.f32 %v132, %v547
    %v549 = vpop.f32.mrb[0].mxu0
    %550 = vdwg.mxu0
    %v551 = vmax.f32 %v425, 0.0
    %v552 = vmax.f32 %v428, 0.0
    %v553 = vmax.f32 %v433, 0.0
    %v554 = vmax.f32 %v436, 0.0
    %v555 = vmax.f32 %v441, 0.0
    %v556 = vmax.f32 %v444, 0.0
    %v557 = vmax.f32 %v449, 0.0
    %v558 = vmax.f32 %v452, 0.0
    %v559 = vmax.f32 %v457, 0.0
    %v560 = vmax.f32 %v460, 0.0
    %v561 = vmax.f32 %v465, 0.0
    %v562 = vmax.f32 %v468, 0.0
    %v563 = vmax.f32 %v473, 0.0
    %v564 = vmax.f32 %v476, 0.0
    %v565 = vmax.f32 %v481, 0.0
    %v566 = vmax.f32 %v484, 0.0
    %v567 = vmax.f32 %v489, 0.0
    %v568 = vmax.f32 %v492, 0.0
    %v569 = vmax.f32 %v497, 0.0
    %v570 = vmax.f32 %v500, 0.0
    %v571 = vmax.f32 %v505, 0.0
    %v572 = vmax.f32 %v508, 0.0
    %v573 = vmax.f32 %v513, 0.0
    %v574 = vmax.f32 %v516, 0.0
    %v575 = vmax.f32 %v521, 0.0
    %v576 = vmax.f32 %v524, 0.0
    %v577 = vmax.f32 %v529, 0.0
    %v578 = vmax.f32 %v532, 0.0
    %v579 = vmax.f32 %v537, 0.0
    %v580 = vmax.f32 %v540, 0.0
    %v581 = vmax.f32 %v545, 0.0
    %v582 = vmax.f32 %v548, 0.0
    %v583 = vpack.c.bf16 %v552, %v551
    %v584 = vpack.c.bf16 %v554, %v553
    %v585 = vpack.c.bf16 %v556, %v555
    %v586 = vpack.c.bf16 %v558, %v557
    %v587 = vpack.c.bf16 %v560, %v559
    %v588 = vpack.c.bf16 %v562, %v561
    %v589 = vpack.c.bf16 %v564, %v563
    %v590 = vpack.c.bf16 %v566, %v565
    %v591 = vpack.c.bf16 %v568, %v567
    %v592 = vpack.c.bf16 %v570, %v569
    %v593 = vpack.c.bf16 %v572, %v571
    %v594 = vpack.c.bf16 %v574, %v573
    %v595 = vpack.c.bf16 %v576, %v575
    %v596 = vpack.c.bf16 %v578, %v577
    %v597 = vpack.c.bf16 %v580, %v579
    %v598 = vpack.c.bf16 %v582, %v581
    %v599 = vld [vmem:[#allocation7] sm:$0xf]
    %v600 = vld [vmem:[#allocation7 + $0x4] sm:$0xf]
    %v601 = vld [vmem:[#allocation7 + $0x8] sm:$0xf]
    %v602 = vld [vmem:[#allocation7 + $0xc] sm:$0xf]
    %v603 = vld [vmem:[#allocation7 + $0x10] sm:$0xf]
    %v604 = vld [vmem:[#allocation7 + $0x14] sm:$0xf]
    %v605 = vld [vmem:[#allocation7 + $0x18] sm:$0xf]
    %v606 = vld [vmem:[#allocation7 + $0x1c] sm:$0xf]
    %v607 = vld [vmem:[#allocation7 + $0x20] sm:$0xf]
    %v608 = vld [vmem:[#allocation7 + $0x24] sm:$0xf]
    %v609 = vld [vmem:[#allocation7 + $0x28] sm:$0xf]
    %v610 = vld [vmem:[#allocation7 + $0x2c] sm:$0xf]
    %v611 = vld [vmem:[#allocation7 + $0x30] sm:$0xf]
    %v612 = vld [vmem:[#allocation7 + $0x34] sm:$0xf]
    %v613 = vld [vmem:[#allocation7 + $0x38] sm:$0xf]
    %v614 = vld [vmem:[#allocation7 + $0x3c] sm:$0xf]
    %v615 = vld [vmem:[%s4] sm:$0x1]
    %v617 = vlaneseq
    %v618 = vshrl.u32 %v617, 7
    %v619 = vsub.s32 0, %v618
    %v620 = vrot.slane %v615, %v619
    %v638 = vunpack.c.l.b16 %v599
    %v639 = vunpack.c.l.b16 %v600
    %v640 = vunpack.c.l.b16 %v601
    %v641 = vunpack.c.l.b16 %v602
    %v642 = vunpack.c.l.b16 %v603
    %v643 = vunpack.c.l.b16 %v604
    %v644 = vunpack.c.l.b16 %v605
    %v645 = vunpack.c.l.b16 %v606
    %v646 = vunpack.c.l.b16 %v607
    %v647 = vunpack.c.l.b16 %v608
    %v648 = vunpack.c.l.b16 %v609
    %v649 = vunpack.c.l.b16 %v610
    %v650 = vunpack.c.l.b16 %v611
    %v651 = vunpack.c.l.b16 %v612
    %v652 = vunpack.c.l.b16 %v613
    %v653 = vunpack.c.l.b16 %v614
    %v654 = vpack.c.b16 %v639, %v638
    %v655 = vpack.c.b16 %v641, %v640
    %v656 = vpack.c.b16 %v643, %v642
    %v657 = vpack.c.b16 %v645, %v644
    %v658 = vpack.c.b16 %v647, %v646
    %v659 = vpack.c.b16 %v649, %v648
    %v660 = vpack.c.b16 %v651, %v650
    %v661 = vpack.c.b16 %v653, %v652
    %670 = vmatprep.subr.bf16.mxu0 0
    %671 = vmatpush1.bf16.msra.mxu0 %v654
    %672 = vmatprep.subr.bf16.mxu0 0
    %673 = vmatpush1.bf16.msra.mxu0 %v655
    %674 = vmatprep.subr.bf16.mxu0 0
    %675 = vmatpush1.bf16.msra.mxu0 %v656
    %676 = vmatprep.subr.bf16.mxu0 0
    %677 = vmatpush1.bf16.msra.mxu0 %v657
    %678 = vmatprep.subr.bf16.mxu0 0
    %679 = vmatpush1.bf16.msra.mxu0 %v658
    %680 = vmatprep.subr.bf16.mxu0 0
    %681 = vmatpush1.bf16.msra.mxu0 %v659
    %682 = vmatprep.subr.bf16.mxu0 0
    %683 = vmatpush1.bf16.msra.mxu0 %v660
    %684 = vmatprep.subr.bf16.mxu0 0
    %685 = vmatpush1.bf16.msra.mxu0 %v661
    %686 = vmatprep.subr.bf16.mxu0 0
    %687 = vmatpush1.bf16.msra.mxu0 0
    %688 = vmatprep.subr.bf16.mxu0 0
    %689 = vmatpush1.bf16.msra.mxu0 0
    %690 = vmatprep.subr.bf16.mxu0 0
    %691 = vmatpush1.bf16.msra.mxu0 0
    %692 = vmatprep.subr.bf16.mxu0 0
    %693 = vmatpush1.bf16.msra.mxu0 0
    %694 = vmatprep.subr.bf16.mxu0 0
    %695 = vmatpush1.bf16.msra.mxu0 0
    %696 = vmatprep.subr.bf16.mxu0 0
    %697 = vmatpush1.bf16.msra.mxu0 0
    %698 = vmatprep.subr.bf16.mxu0 0
    %699 = vmatpush1.bf16.msra.mxu0 0
    %700 = vmatprep.subr.bf16.mxu0 0
    %701 = vmatpush1.bf16.msra.mxu0 0
    %702 = vmatprep.mubr.bf16.mxu0 0
    %703 = vmatmul.mubr.bf16.gmra.mrb[0].mxu0 %v583
    %v704 = vpop.f32.mrb[0].mxu0
    %v705 = vadd.f32 %v620, %v704
    %v706 = vpop.f32.mrb[0].mxu0
    %v707 = vpop.f32.mrb[0].mxu0
    %v708 = vadd.f32 %v620, %v707
    %v709 = vpop.f32.mrb[0].mxu0
    %710 = vmatprep.mubr.bf16.mxu0 0
    %711 = vmatmul.mubr.bf16.gmra.mrb[0].mxu0 %v584
    %v712 = vpop.f32.mrb[0].mxu0
    %v713 = vadd.f32 %v620, %v712
    %v714 = vpop.f32.mrb[0].mxu0
    %v715 = vpop.f32.mrb[0].mxu0
    %v716 = vadd.f32 %v620, %v715
    %v717 = vpop.f32.mrb[0].mxu0
    %718 = vmatprep.mubr.bf16.mxu0 0
    %719 = vmatmul.mubr.bf16.gmra.mrb[0].mxu0 %v585
    %v720 = vpop.f32.mrb[0].mxu0
    %v721 = vadd.f32 %v620, %v720
    %v722 = vpop.f32.mrb[0].mxu0
    %v723 = vpop.f32.mrb[0].mxu0
    %v724 = vadd.f32 %v620, %v723
    %v725 = vpop.f32.mrb[0].mxu0
    %726 = vmatprep.mubr.bf16.mxu0 0
    %727 = vmatmul.mubr.bf16.gmra.mrb[0].mxu0 %v586
    %v728 = vpop.f32.mrb[0].mxu0
    %v729 = vadd.f32 %v620, %v728
    %v730 = vpop.f32.mrb[0].mxu0
    %v731 = vpop.f32.mrb[0].mxu0
    %v732 = vadd.f32 %v620, %v731
    %v733 = vpop.f32.mrb[0].mxu0
    %734 = vmatprep.mubr.bf16.mxu0 0
    %735 = vmatmul.mubr.bf16.gmra.mrb[0].mxu0 %v587
    %v736 = vpop.f32.mrb[0].mxu0
    %v737 = vadd.f32 %v620, %v736
    %v738 = vpop.f32.mrb[0].mxu0
    %v739 = vpop.f32.mrb[0].mxu0
    %v740 = vadd.f32 %v620, %v739
    %v741 = vpop.f32.mrb[0].mxu0
    %742 = vmatprep.mubr.bf16.mxu0 0
    %743 = vmatmul.mubr.bf16.gmra.mrb[0].mxu0 %v588
    %v744 = vpop.f32.mrb[0].mxu0
    %v745 = vadd.f32 %v620, %v744
    %v746 = vpop.f32.mrb[0].mxu0
    %v747 = vpop.f32.mrb[0].mxu0
    %v748 = vadd.f32 %v620, %v747
    %v749 = vpop.f32.mrb[0].mxu0
    %750 = vmatprep.mubr.bf16.mxu0 0
    %751 = vmatmul.mubr.bf16.gmra.mrb[0].mxu0 %v589
    %v752 = vpop.f32.mrb[0].mxu0
    %v753 = vadd.f32 %v620, %v752
    %v754 = vpop.f32.mrb[0].mxu0
    %v755 = vpop.f32.mrb[0].mxu0
    %v756 = vadd.f32 %v620, %v755
    %v757 = vpop.f32.mrb[0].mxu0
    %758 = vmatprep.mubr.bf16.mxu0 0
    %759 = vmatmul.mubr.bf16.gmra.mrb[0].mxu0 %v590
    %v760 = vpop.f32.mrb[0].mxu0
    %v761 = vadd.f32 %v620, %v760
    %v762 = vpop.f32.mrb[0].mxu0
    %v763 = vpop.f32.mrb[0].mxu0
    %v764 = vadd.f32 %v620, %v763
    %v765 = vpop.f32.mrb[0].mxu0
    %766 = vmatprep.mubr.bf16.mxu0 0
    %767 = vmatmul.mubr.bf16.gmra.mrb[0].mxu0 %v591
    %v768 = vpop.f32.mrb[0].mxu0
    %v769 = vadd.f32 %v620, %v768
    %v770 = vpop.f32.mrb[0].mxu0
    %v771 = vpop.f32.mrb[0].mxu0
    %v772 = vadd.f32 %v620, %v771
    %v773 = vpop.f32.mrb[0].mxu0
    %774 = vmatprep.mubr.bf16.mxu0 0
    %775 = vmatmul.mubr.bf16.gmra.mrb[0].mxu0 %v592
    %v776 = vpop.f32.mrb[0].mxu0
    %v777 = vadd.f32 %v620, %v776
    %v778 = vpop.f32.mrb[0].mxu0
    %v779 = vpop.f32.mrb[0].mxu0
    %v780 = vadd.f32 %v620, %v779
    %v781 = vpop.f32.mrb[0].mxu0
    %782 = vmatprep.mubr.bf16.mxu0 0
    %783 = vmatmul.mubr.bf16.gmra.mrb[0].mxu0 %v593
    %v784 = vpop.f32.mrb[0].mxu0
    %v785 = vadd.f32 %v620, %v784
    %v786 = vpop.f32.mrb[0].mxu0
    %v787 = vpop.f32.mrb[0].mxu0
    %v788 = vadd.f32 %v620, %v787
    %v789 = vpop.f32.mrb[0].mxu0
    %790 = vmatprep.mubr.bf16.mxu0 0
    %791 = vmatmul.mubr.bf16.gmra.mrb[0].mxu0 %v594
    %v792 = vpop.f32.mrb[0].mxu0
    %v793 = vadd.f32 %v620, %v792
    %v794 = vpop.f32.mrb[0].mxu0
    %v795 = vpop.f32.mrb[0].mxu0
    %v796 = vadd.f32 %v620, %v795
    %v797 = vpop.f32.mrb[0].mxu0
    %798 = vmatprep.mubr.bf16.mxu0 0
    %799 = vmatmul.mubr.bf16.gmra.mrb[0].mxu0 %v595
    %v800 = vpop.f32.mrb[0].mxu0
    %v801 = vadd.f32 %v620, %v800
    %v802 = vpop.f32.mrb[0].mxu0
    %v803 = vpop.f32.mrb[0].mxu0
    %v804 = vadd.f32 %v620, %v803
    %v805 = vpop.f32.mrb[0].mxu0
    %806 = vmatprep.mubr.bf16.mxu0 0
    %807 = vmatmul.mubr.bf16.gmra.mrb[0].mxu0 %v596
    %v808 = vpop.f32.mrb[0].mxu0
    %v809 = vadd.f32 %v620, %v808
    %v810 = vpop.f32.mrb[0].mxu0
    %v811 = vpop.f32.mrb[0].mxu0
    %v812 = vadd.f32 %v620, %v811
    %v813 = vpop.f32.mrb[0].mxu0
    %814 = vmatprep.mubr.bf16.mxu0 0
    %815 = vmatmul.mubr.bf16.gmra.mrb[0].mxu0 %v597
    %v816 = vpop.f32.mrb[0].mxu0
    %v817 = vadd.f32 %v620, %v816
    %v818 = vpop.f32.mrb[0].mxu0
    %v819 = vpop.f32.mrb[0].mxu0
    %v820 = vadd.f32 %v620, %v819
    %v821 = vpop.f32.mrb[0].mxu0
    %822 = vmatprep.mubr.bf16.mxu0 0
    %823 = vmatmul.mubr.bf16.gmra.mrb[0].mxu0 %v598
    %v824 = vpop.f32.mrb[0].mxu0
    %v825 = vadd.f32 %v620, %v824
    %v826 = vpop.f32.mrb[0].mxu0
    %v827 = vpop.f32.mrb[0].mxu0
    %v828 = vadd.f32 %v620, %v827
    %v829 = vpop.f32.mrb[0].mxu0
    %830 = vdwg.mxu0
    %831 = vst [vmem:[#allocation8] sm:$0xff] %v705
    %832 = vst [vmem:[#allocation8 + $0x8] sm:$0xff] %v708
    %833 = vst [vmem:[#allocation8 + $0x10] sm:$0xff] %v713
    %834 = vst [vmem:[#allocation8 + $0x18] sm:$0xff] %v716
    %835 = vst [vmem:[#allocation8 + $0x20] sm:$0xff] %v721
    %836 = vst [vmem:[#allocation8 + $0x28] sm:$0xff] %v724
    %837 = vst [vmem:[#allocation8 + $0x30] sm:$0xff] %v729
    %838 = vst [vmem:[#allocation8 + $0x38] sm:$0xff] %v732
    %839 = vst [vmem:[#allocation8 + $0x40] sm:$0xff] %v737
    %840 = vst [vmem:[#allocation8 + $0x48] sm:$0xff] %v740
    %841 = vst [vmem:[#allocation8 + $0x50] sm:$0xff] %v745
    %842 = vst [vmem:[#allocation8 + $0x58] sm:$0xff] %v748
    %843 = vst [vmem:[#allocation8 + $0x60] sm:$0xff] %v753
    %844 = vst [vmem:[#allocation8 + $0x68] sm:$0xff] %v756
    %845 = vst [vmem:[#allocation8 + $0x70] sm:$0xff] %v761
    %846 = vst [vmem:[#allocation8 + $0x78] sm:$0xff] %v764
    %847 = vst [vmem:[#allocation8 + $0x80] sm:$0xff] %v769
    %848 = vst [vmem:[#allocation8 + $0x88] sm:$0xff] %v772
    %849 = vst [vmem:[#allocation8 + $0x90] sm:$0xff] %v777
    %850 = vst [vmem:[#allocation8 + $0x98] sm:$0xff] %v780
    %851 = vst [vmem:[#allocation8 + $0xa0] sm:$0xff] %v785
    %852 = vst [vmem:[#allocation8 + $0xa8] sm:$0xff] %v788
    %853 = vst [vmem:[#allocation8 + $0xb0] sm:$0xff] %v793
    %854 = vst [vmem:[#allocation8 + $0xb8] sm:$0xff] %v796
    %855 = vst [vmem:[#allocation8 + $0xc0] sm:$0xff] %v801
    %856 = vst [vmem:[#allocation8 + $0xc8] sm:$0xff] %v804
    %857 = vst [vmem:[#allocation8 + $0xd0] sm:$0xff] %v809
    %858 = vst [vmem:[#allocation8 + $0xd8] sm:$0xff] %v812
    %859 = vst [vmem:[#allocation8 + $0xe0] sm:$0xff] %v817
    %860 = vst [vmem:[#allocation8 + $0xe8] sm:$0xff] %v820
    %861 = vst [vmem:[#allocation8 + $0xf0] sm:$0xff] %v825
    %862 = vst [vmem:[#allocation8 + $0xf8] sm:$0xff] %v828
    // Predicated region
    $region34: #{tpu_custom_call.1} parent=1 // pred_check
      _
    $region35: #{tpu_custom_call.1} parent=1 // pred_check_branch
      %864 = sbr.rel (0) target = $region37
    $region36: #{tpu_custom_call.1} parent=1 // pred_region
      %s866 = ssub.s32 4096, 4096
      %867 = vsyncadd [#allocation4], %s866
      %s868 = sshll.u32 [#allocation8], 4
      %s869 = int_to_ptr.vmem [resolvable:$true] %s868
      %874 = dma.vmem_to_hbm [thread:$0]  %s869, 4096, %s5, [#allocation4], 128, 128, 8
    $region37: #{tpu_custom_call.1} parent=1 // pred_fallthru
      _
    // Predicated region
    $region38: #{tpu_custom_call.1} parent=1 // pred_check
      _
    $region39: #{tpu_custom_call.1} parent=1 // pred_check_branch
      %876 = sbr.rel (0) target = $region41
    $region40: #{tpu_custom_call.1} parent=1 // pred_region
      %877 = dma.done [#allocation4], 4096
    $region41: #{tpu_custom_call.1} parent=1 // pred_fallthru
      _
    %878 = vsyncpa [#allocation3], 1
    %879 = vsyncpa [#allocation6], 1
    %880 = vsyncpa [#allocation4], 1

// kernel: tpu_custom_call.1
$region0: #{tpu_custom_call.1}
  #allocation0 [shape = 'u32[]', space=smem, size = 0x4, offset = 0x4, fixed_abs, tag = 'smem constant byte address 0x4 - core index']
  #allocation1 [shape = 'u32[144,128]{1,0:T(1,128)}', space=vmem, size = 0x12000, scoped, tag = 'internal scratch']
  %s0 = inlined_call_operand.hbm [shape: bf16[256,256], index: 0, kind: input, shape index: {}]
  %s1 = inlined_call_operand.hbm [shape: bf16[256,128], index: 1, kind: input, shape index: {}]
  %s2 = inlined_call_operand.vmem [shape: f32[1,128], index: 2, kind: input, shape index: {}]
  %s3 = inlined_call_operand.hbm [shape: bf16[128,128], index: 3, kind: input, shape index: {}]
  %s4 = inlined_call_operand.vmem [shape: f32[1,128], index: 4, kind: input, shape index: {}]
  %s5 = inlined_call_operand.hbm [shape: f32[256,128], index: 5, kind: output, shape index: {}]
  %s6 = sld [smem:[#allocation0]]
  $region42: #{tpu_custom_call.1} parent=0
    _
  %s8 = ssub.s32 1, %s6
  %s9 = scalar_select 0, %s8, %s6
  $region1: #{tpu_custom_call.1} parent=0
    #allocation2 [shape = 'u8[131072]{0}', space=vmem, size = 0x20000, scoped, tag = 'input window, operand 0, single buffered']
    #allocation3 [shape = 's32[1]{0}', space=sflag, size = 0x4, scoped, tag = 'scoped memory for tpu_custom_call.1']
    #allocation4 [shape = 's32[1]{0}', space=sflag, size = 0x4, scoped, tag = 'scoped memory for tpu_custom_call.1']
    #allocation5 [shape = 'u8[65536]{0}', space=vmem, size = 0x10000, scoped, tag = 'input window, operand 1, single buffered']
    #allocation6 [shape = 's32[1]{0}', space=sflag, size = 0x4, scoped, tag = 'scoped memory for tpu_custom_call.1']
    #allocation7 [shape = 'u8[32768]{0}', space=vmem, size = 0x8000, scoped, tag = 'input window, operand 3, single buffered']
    #allocation8 [shape = 'u8[131072]{0}', space=vmem, size = 0x20000, scoped, tag = 'output window, operand 0, single buffered']
    %10 = vsyncpa [#allocation3], 0
    %11 = vsyncpa [#allocation6], 0
    %12 = vsyncpa [#allocation4], 0
    // Predicated region
    $region2: #{tpu_custom_call.1} parent=1 // pred_check
      _
    $region3: #{tpu_custom_call.1} parent=1 // pred_check_branch
      %14 = sbr.rel (0) target = $region5
    $region4: #{tpu_custom_call.1} parent=1 // pred_region
      %s16 = ssub.s32 4096, 4096
      %17 = vsyncadd [#allocation3], %s16
      %s18 = sshll.u32 [#allocation2], 4
      %s19 = int_to_ptr.vmem [resolvable:$true] %s18
      %24 = dma.hbm_to_vmem [thread:$0]  %s0, 4096, %s19, [#allocation3], 128, 128, 8
    $region5: #{tpu_custom_call.1} parent=1 // pred_fallthru
      _
    // Predicated region
    $region6: #{tpu_custom_call.1} parent=1 // pred_check
      _
    $region7: #{tpu_custom_call.1} parent=1 // pred_check_branch
      %26 = sbr.rel (0) target = $region9
    $region8: #{tpu_custom_call.1} parent=1 // pred_region
      %s28 = ssub.s32 2048, 2048
      %29 = vsyncadd [#allocation6], %s28
      %s30 = sshll.u32 [#allocation5], 4
      %s31 = int_to_ptr.vmem [resolvable:$true] %s30
      %36 = dma.hbm_to_vmem [thread:$0]  %s1, 2048, %s31, [#allocation6], 64, 64, 4
    $region9: #{tpu_custom_call.1} parent=1 // pred_fallthru
      _
    // Predicated region
    $region10: #{tpu_custom_call.1} parent=1 // pred_check
      _
    $region11: #{tpu_custom_call.1} parent=1 // pred_check_branch
      %38 = sbr.rel (0) target = $region13
    $region12: #{tpu_custom_call.1} parent=1 // pred_region
      _
    $region13: #{tpu_custom_call.1} parent=1 // pred_fallthru
      _
    // Predicated region
    $region14: #{tpu_custom_call.1} parent=1 // pred_check
      _
    $region15: #{tpu_custom_call.1} parent=1 // pred_check_branch
      %40 = sbr.rel (0) target = $region17
    $region16: #{tpu_custom_call.1} parent=1 // pred_region
      %s42 = ssub.s32 1024, 1024
      %43 = vsyncadd [#allocation6], %s42
      %s44 = sshll.u32 [#allocation7], 4
      %s45 = int_to_ptr.vmem [resolvable:$true] %s44
      %50 = dma.hbm_to_vmem [thread:$0]  %s3, 1024, %s45, [#allocation6], 64, 64, 4
    $region17: #{tpu_custom_call.1} parent=1 // pred_fallthru
      _
    // Predicated region
    $region18: #{tpu_custom_call.1} parent=1 // pred_check
      _
    $region19: #{tpu_custom_call.1} parent=1 // pred_check_branch
      %52 = sbr.rel (0) target = $region21
    $region20: #{tpu_custom_call.1} parent=1 // pred_region
      _
    $region21: #{tpu_custom_call.1} parent=1 // pred_fallthru
      _
    // Predicated region
    $region22: #{tpu_custom_call.1} parent=1 // pred_check
      _
    $region23: #{tpu_custom_call.1} parent=1 // pred_check_branch
      %54 = sbr.rel (0) target = $region25
    $region24: #{tpu_custom_call.1} parent=1 // pred_region
      %55 = dma.done [#allocation3], 4096
    $region25: #{tpu_custom_call.1} parent=1 // pred_fallthru
      _
    // Predicated region
    $region26: #{tpu_custom_call.1} parent=1 // pred_check
      _
    $region27: #{tpu_custom_call.1} parent=1 // pred_check_branch
      %57 = sbr.rel (0) target = $region29
    $region28: #{tpu_custom_call.1} parent=1 // pred_region
      %58 = dma.done [#allocation6], 2048
    $region29: #{tpu_custom_call.1} parent=1 // pred_fallthru
      _
    // Predicated region
    $region30: #{tpu_custom_call.1} parent=1 // pred_check
      _
    $region31: #{tpu_custom_call.1} parent=1 // pred_check_branch
      %60 = sbr.rel (0) target = $region33
    $region32: #{tpu_custom_call.1} parent=1 // pred_region
      %61 = dma.done [#allocation6], 1024
    $region33: #{tpu_custom_call.1} parent=1 // pred_fallthru
      _
    %v63 = vld [vmem:[#allocation2] sm:$0xff]
    %v64 = vld [vmem:[#allocation2 + $0x8] sm:$0xff]
    %v65 = vld [vmem:[#allocation2 + $0x10] sm:$0xff]
    %v66 = vld [vmem:[#allocation2 + $0x18] sm:$0xff]
    %v67 = vld [vmem:[#allocation2 + $0x20] sm:$0xff]
    %v68 = vld [vmem:[#allocation2 + $0x28] sm:$0xff]
    %v69 = vld [vmem:[#allocation2 + $0x30] sm:$0xff]
    %v70 = vld [vmem:[#allocation2 + $0x38] sm:$0xff]
    %v71 = vld [vmem:[#allocation2 + $0x40] sm:$0xff]
    %v72 = vld [vmem:[#allocation2 + $0x48] sm:$0xff]
    %v73 = vld [vmem:[#allocation2 + $0x50] sm:$0xff]
    %v74 = vld [vmem:[#allocation2 + $0x58] sm:$0xff]
    %v75 = vld [vmem:[#allocation2 + $0x60] sm:$0xff]
    %v76 = vld [vmem:[#allocation2 + $0x68] sm:$0xff]
    %v77 = vld [vmem:[#allocation2 + $0x70] sm:$0xff]
    %v78 = vld [vmem:[#allocation2 + $0x78] sm:$0xff]
    %v79 = vld [vmem:[#allocation2 + $0x80] sm:$0xff]
    %v80 = vld [vmem:[#allocation2 + $0x88] sm:$0xff]
    %v81 = vld [vmem:[#allocation2 + $0x90] sm:$0xff]
    %v82 = vld [vmem:[#allocation2 + $0x98] sm:$0xff]
    %v83 = vld [vmem:[#allocation2 + $0xa0] sm:$0xff]
    %v84 = vld [vmem:[#allocation2 + $0xa8] sm:$0xff]
    %v85 = vld [vmem:[#allocation2 + $0xb0] sm:$0xff]
    %v86 = vld [vmem:[#allocation2 + $0xb8] sm:$0xff]
    %v87 = vld [vmem:[#allocation2 + $0xc0] sm:$0xff]
    %v88 = vld [vmem:[#allocation2 + $0xc8] sm:$0xff]
    %v89 = vld [vmem:[#allocation2 + $0xd0] sm:$0xff]
    %v90 = vld [vmem:[#allocation2 + $0xd8] sm:$0xff]
    %v91 = vld [vmem:[#allocation2 + $0xe0] sm:$0xff]
    %v92 = vld [vmem:[#allocation2 + $0xe8] sm:$0xff]
    %v93 = vld [vmem:[#allocation2 + $0xf0] sm:$0xff]
    %v94 = vld [vmem:[#allocation2 + $0xf8] sm:$0xff]
    %v95 = vld [vmem:[#allocation5] sm:$0xf]
    %v96 = vld [vmem:[#allocation5 + $0x4] sm:$0xf]
    %v97 = vld [vmem:[#allocation5 + $0x8] sm:$0xf]
    %v98 = vld [vmem:[#allocation5 + $0xc] sm:$0xf]
    %v99 = vld [vmem:[#allocation5 + $0x10] sm:$0xf]
    %v100 = vld [vmem:[#allocation5 + $0x14] sm:$0xf]
    %v101 = vld [vmem:[#allocation5 + $0x18] sm:$0xf]
    %v102 = vld [vmem:[#allocation5 + $0x1c] sm:$0xf]
    %v103 = vld [vmem:[#allocation5 + $0x20] sm:$0xf]
    %v104 = vld [vmem:[#allocation5 + $0x24] sm:$0xf]
    %v105 = vld [vmem:[#allocation5 + $0x28] sm:$0xf]
    %v106 = vld [vmem:[#allocation5 + $0x2c] sm:$0xf]
    %v107 = vld [vmem:[#allocation5 + $0x30] sm:$0xf]
    %v108 = vld [vmem:[#allocation5 + $0x34] sm:$0xf]
    %v109 = vld [vmem:[#allocation5 + $0x38] sm:$0xf]
    %v110 = vld [vmem:[#allocation5 + $0x3c] sm:$0xf]
    %v111 = vld [vmem:[#allocation5 + $0x40] sm:$0xf]
    %v112 = vld [vmem:[#allocation5 + $0x44] sm:$0xf]
    %v113 = vld [vmem:[#allocation5 + $0x48] sm:$0xf]
    %v114 = vld [vmem:[#allocation5 + $0x4c] sm:$0xf]
    %v115 = vld [vmem:[#allocation5 + $0x50] sm:$0xf]
    %v116 = vld [vmem:[#allocation5 + $0x54] sm:$0xf]
    %v117 = vld [vmem:[#allocation5 + $0x58] sm:$0xf]
    %v118 = vld [vmem:[#allocation5 + $0x5c] sm:$0xf]
    %v119 = vld [vmem:[#allocation5 + $0x60] sm:$0xf]
    %v120 = vld [vmem:[#allocation5 + $0x64] sm:$0xf]
    %v121 = vld [vmem:[#allocation5 + $0x68] sm:$0xf]
    %v122 = vld [vmem:[#allocation5 + $0x6c] sm:$0xf]
    %v123 = vld [vmem:[#allocation5 + $0x70] sm:$0xf]
    %v124 = vld [vmem:[#allocation5 + $0x74] sm:$0xf]
    %v125 = vld [vmem:[#allocation5 + $0x78] sm:$0xf]
    %v126 = vld [vmem:[#allocation5 + $0x7c] sm:$0xf]
    %v127 = vld [vmem:[%s2] sm:$0x1]
    %v129 = vlaneseq
    %v130 = vshrl.u32 %v129, 7
    %v131 = vsub.s32 0, %v130
    %v132 = vrot.slane %v127, %v131
    %v166 = vunpack.c.l.b16 %v63
    %v167 = vunpack.c.h.b16 %v63
    %v168 = vunpack.c.l.b16 %v64
    %v169 = vunpack.c.h.b16 %v64
    %v170 = vunpack.c.l.b16 %v65
    %v171 = vunpack.c.h.b16 %v65
    %v172 = vunpack.c.l.b16 %v66
    %v173 = vunpack.c.h.b16 %v66
    %v174 = vunpack.c.l.b16 %v67
    %v175 = vunpack.c.h.b16 %v67
    %v176 = vunpack.c.l.b16 %v68
    %v177 = vunpack.c.h.b16 %v68
    %v178 = vunpack.c.l.b16 %v69
    %v179 = vunpack.c.h.b16 %v69
    %v180 = vunpack.c.l.b16 %v70
    %v181 = vunpack.c.h.b16 %v70
    %v182 = vunpack.c.l.b16 %v71
    %v183 = vunpack.c.h.b16 %v71
    %v184 = vunpack.c.l.b16 %v72
    %v185 = vunpack.c.h.b16 %v72
    %v186 = vunpack.c.l.b16 %v73
    %v187 = vunpack.c.h.b16 %v73
    %v188 = vunpack.c.l.b16 %v74
    %v189 = vunpack.c.h.b16 %v74
    %v190 = vunpack.c.l.b16 %v75
    %v191 = vunpack.c.h.b16 %v75
    %v192 = vunpack.c.l.b16 %v76
    %v193 = vunpack.c.h.b16 %v76
    %v194 = vunpack.c.l.b16 %v77
    %v195 = vunpack.c.h.b16 %v77
    %v196 = vunpack.c.l.b16 %v78
    %v197 = vunpack.c.h.b16 %v78
    %v198 = vunpack.c.l.b16 %v79
    %v199 = vunpack.c.h.b16 %v79
    %v200 = vunpack.c.l.b16 %v80
    %v201 = vunpack.c.h.b16 %v80
    %v202 = vunpack.c.l.b16 %v81
    %v203 = vunpack.c.h.b16 %v81
    %v204 = vunpack.c.l.b16 %v82
    %v205 = vunpack.c.h.b16 %v82
    %v206 = vunpack.c.l.b16 %v83
    %v207 = vunpack.c.h.b16 %v83
    %v208 = vunpack.c.l.b16 %v84
    %v209 = vunpack.c.h.b16 %v84
    %v210 = vunpack.c.l.b16 %v85
    %v211 = vunpack.c.h.b16 %v85
    %v212 = vunpack.c.l.b16 %v86
    %v213 = vunpack.c.h.b16 %v86
    %v214 = vunpack.c.l.b16 %v87
    %v215 = vunpack.c.h.b16 %v87
    %v216 = vunpack.c.l.b16 %v88
    %v217 = vunpack.c.h.b16 %v88
    %v218 = vunpack.c.l.b16 %v89
    %v219 = vunpack.c.h.b16 %v89
    %v220 = vunpack.c.l.b16 %v90
    %v221 = vunpack.c.h.b16 %v90
    %v222 = vunpack.c.l.b16 %v91
    %v223 = vunpack.c.h.b16 %v91
    %v224 = vunpack.c.l.b16 %v92
    %v225 = vunpack.c.h.b16 %v92
    %v226 = vunpack.c.l.b16 %v93
    %v227 = vunpack.c.h.b16 %v93
    %v228 = vunpack.c.l.b16 %v94
    %v229 = vunpack.c.h.b16 %v94
    %v230 = vpack.c.b16 %v168, %v166
    %v231 = vpack.c.b16 %v169, %v167
    %v232 = vpack.c.b16 %v172, %v170
    %v233 = vpack.c.b16 %v173, %v171
    %v234 = vpack.c.b16 %v176, %v174
    %v235 = vpack.c.b16 %v177, %v175
    %v236 = vpack.c.b16 %v180, %v178
    %v237 = vpack.c.b16 %v181, %v179
    %v238 = vpack.c.b16 %v184, %v182
    %v239 = vpack.c.b16 %v185, %v183
    %v240 = vpack.c.b16 %v188, %v186
    %v241 = vpack.c.b16 %v189, %v187
    %v242 = vpack.c.b16 %v192, %v190
    %v243 = vpack.c.b16 %v193, %v191
    %v244 = vpack.c.b16 %v196, %v194
    %v245 = vpack.c.b16 %v197, %v195
    %v246 = vpack.c.b16 %v200, %v198
    %v247 = vpack.c.b16 %v201, %v199
    %v248 = vpack.c.b16 %v204, %v202
    %v249 = vpack.c.b16 %v205, %v203
    %v250 = vpack.c.b16 %v208, %v206
    %v251 = vpack.c.b16 %v209, %v207
    %v252 = vpack.c.b16 %v212, %v210
    %v253 = vpack.c.b16 %v213, %v211
    %v254 = vpack.c.b16 %v216, %v214
    %v255 = vpack.c.b16 %v217, %v215
    %v256 = vpack.c.b16 %v220, %v218
    %v257 = vpack.c.b16 %v221, %v219
    %v258 = vpack.c.b16 %v224, %v222
    %v259 = vpack.c.b16 %v225, %v223
    %v260 = vpack.c.b16 %v228, %v226
    %v261 = vpack.c.b16 %v229, %v227
    %v326 = vunpack.c.l.b16 %v95
    %v327 = vunpack.c.l.b16 %v96
    %v328 = vunpack.c.l.b16 %v97
    %v329 = vunpack.c.l.b16 %v98
    %v330 = vunpack.c.l.b16 %v99
    %v331 = vunpack.c.l.b16 %v100
    %v332 = vunpack.c.l.b16 %v101
    %v333 = vunpack.c.l.b16 %v102
    %v334 = vunpack.c.l.b16 %v103
    %v335 = vunpack.c.l.b16 %v104
    %v336 = vunpack.c.l.b16 %v105
    %v337 = vunpack.c.l.b16 %v106
    %v338 = vunpack.c.l.b16 %v107
    %v339 = vunpack.c.l.b16 %v108
    %v340 = vunpack.c.l.b16 %v109
    %v341 = vunpack.c.l.b16 %v110
    %v342 = vunpack.c.l.b16 %v111
    %v343 = vunpack.c.l.b16 %v112
    %v344 = vunpack.c.l.b16 %v113
    %v345 = vunpack.c.l.b16 %v114
    %v346 = vunpack.c.l.b16 %v115
    %v347 = vunpack.c.l.b16 %v116
    %v348 = vunpack.c.l.b16 %v117
    %v349 = vunpack.c.l.b16 %v118
    %v350 = vunpack.c.l.b16 %v119
    %v351 = vunpack.c.l.b16 %v120
    %v352 = vunpack.c.l.b16 %v121
    %v353 = vunpack.c.l.b16 %v122
    %v354 = vunpack.c.l.b16 %v123
    %v355 = vunpack.c.l.b16 %v124
    %v356 = vunpack.c.l.b16 %v125
    %v357 = vunpack.c.l.b16 %v126
    %v358 = vpack.c.b16 %v327, %v326
    %v359 = vpack.c.b16 %v329, %v328
    %v360 = vpack.c.b16 %v331, %v330
    %v361 = vpack.c.b16 %v333, %v332
    %v362 = vpack.c.b16 %v335, %v334
    %v363 = vpack.c.b16 %v337, %v336
    %v364 = vpack.c.b16 %v339, %v338
    %v365 = vpack.c.b16 %v341, %v340
    %v366 = vpack.c.b16 %v343, %v342
    %v367 = vpack.c.b16 %v345, %v344
    %v368 = vpack.c.b16 %v347, %v346
    %v369 = vpack.c.b16 %v349, %v348
    %v370 = vpack.c.b16 %v351, %v350
    %v371 = vpack.c.b16 %v353, %v352
    %v372 = vpack.c.b16 %v355, %v354
    %v373 = vpack.c.b16 %v357, %v356
    %390 = vmatprep.subr.bf16.mxu0 0
    %391 = vmatpush1.bf16.msra.mxu0 %v358
    %392 = vmatprep.subr.bf16.mxu0 0
    %393 = vmatpush1.bf16.msra.mxu0 %v359
    %394 = vmatprep.subr.bf16.mxu0 0
    %395 = vmatpush1.bf16.msra.mxu0 %v360
    %396 = vmatprep.subr.bf16.mxu0 0
    %397 = vmatpush1.bf16.msra.mxu0 %v361
    %398 = vmatprep.subr.bf16.mxu0 0
    %399 = vmatpush1.bf16.msra.mxu0 %v362
    %400 = vmatprep.subr.bf16.mxu0 0
    %401 = vmatpush1.bf16.msra.mxu0 %v363
    %402 = vmatprep.subr.bf16.mxu0 0
    %403 = vmatpush1.bf16.msra.mxu0 %v364
    %404 = vmatprep.subr.bf16.mxu0 0
    %405 = vmatpush1.bf16.msra.mxu0 %v365
    %406 = vmatprep.subr.bf16.mxu0 0
    %407 = vmatpush1.bf16.msra.mxu0 %v366
    %408 = vmatprep.subr.bf16.mxu0 0
    %409 = vmatpush1.bf16.msra.mxu0 %v367
    %410 = vmatprep.subr.bf16.mxu0 0
    %411 = vmatpush1.bf16.msra.mxu0 %v368
    %412 = vmatprep.subr.bf16.mxu0 0
    %413 = vmatpush1.bf16.msra.mxu0 %v369
    %414 = vmatprep.subr.bf16.mxu0 0
    %415 = vmatpush1.bf16.msra.mxu0 %v370
    %416 = vmatprep.subr.bf16.mxu0 0
    %417 = vmatpush1.bf16.msra.mxu0 %v371
    %418 = vmatprep.subr.bf16.mxu0 0
    %419 = vmatpush1.bf16.msra.mxu0 %v372
    %420 = vmatprep.subr.bf16.mxu0 0
    %421 = vmatpush1.bf16.msra.mxu0 %v373
    %422 = vmatprep.mubr.bf16.mxu0 %v231
    %423 = vmatmul.mubr.bf16.gmra.mrb[0].mxu0 %v230
    %v424 = vpop.f32.mrb[0].mxu0
    %v425 = vadd.f32 %v132, %v424
    %v426 = vpop.f32.mrb[0].mxu0
    %v427 = vpop.f32.mrb[0].mxu0
    %v428 = vadd.f32 %v132, %v427
    %v429 = vpop.f32.mrb[0].mxu0
    %430 = vmatprep.mubr.bf16.mxu0 %v233
    %431 = vmatmul.mubr.bf16.gmra.mrb[0].mxu0 %v232
    %v432 = vpop.f32.mrb[0].mxu0
    %v433 = vadd.f32 %v132, %v432
    %v434 = vpop.f32.mrb[0].mxu0
    %v435 = vpop.f32.mrb[0].mxu0
    %v436 = vadd.f32 %v132, %v435
    %v437 = vpop.f32.mrb[0].mxu0
    %438 = vmatprep.mubr.bf16.mxu0 %v235
    %439 = vmatmul.mubr.bf16.gmra.mrb[0].mxu0 %v234
    %v440 = vpop.f32.mrb[0].mxu0
    %v441 = vadd.f32 %v132, %v440
    %v442 = vpop.f32.mrb[0].mxu0
    %v443 = vpop.f32.mrb[0].mxu0
    %v444 = vadd.f32 %v132, %v443
    %v445 = vpop.f32.mrb[0].mxu0
    %446 = vmatprep.mubr.bf16.mxu0 %v237
    %447 = vmatmul.mubr.bf16.gmra.mrb[0].mxu0 %v236
    %v448 = vpop.f32.mrb[0].mxu0
    %v449 = vadd.f32 %v132, %v448
    %v450 = vpop.f32.mrb[0].mxu0
    %v451 = vpop.f32.mrb[0].mxu0
    %v452 = vadd.f32 %v132, %v451
    %v453 = vpop.f32.mrb[0].mxu0
    %454 = vmatprep.mubr.bf16.mxu0 %v239
    %455 = vmatmul.mubr.bf16.gmra.mrb[0].mxu0 %v238
    %v456 = vpop.f32.mrb[0].mxu0
    %v457 = vadd.f32 %v132, %v456
    %v458 = vpop.f32.mrb[0].mxu0
    %v459 = vpop.f32.mrb[0].mxu0
    %v460 = vadd.f32 %v132, %v459
    %v461 = vpop.f32.mrb[0].mxu0
    %462 = vmatprep.mubr.bf16.mxu0 %v241
    %463 = vmatmul.mubr.bf16.gmra.mrb[0].mxu0 %v240
    %v464 = vpop.f32.mrb[0].mxu0
    %v465 = vadd.f32 %v132, %v464
    %v466 = vpop.f32.mrb[0].mxu0
    %v467 = vpop.f32.mrb[0].mxu0
    %v468 = vadd.f32 %v132, %v467
    %v469 = vpop.f32.mrb[0].mxu0
    %470 = vmatprep.mubr.bf16.mxu0 %v243
    %471 = vmatmul.mubr.bf16.gmra.mrb[0].mxu0 %v242
    %v472 = vpop.f32.mrb[0].mxu0
    %v473 = vadd.f32 %v132, %v472
    %v474 = vpop.f32.mrb[0].mxu0
    %v475 = vpop.f32.mrb[0].mxu0
    %v476 = vadd.f32 %v132, %v475
    %v477 = vpop.f32.mrb[0].mxu0
    %478 = vmatprep.mubr.bf16.mxu0 %v245
    %479 = vmatmul.mubr.bf16.gmra.mrb[0].mxu0 %v244
    %v480 = vpop.f32.mrb[0].mxu0
    %v481 = vadd.f32 %v132, %v480
    %v482 = vpop.f32.mrb[0].mxu0
    %v483 = vpop.f32.mrb[0].mxu0
    %v484 = vadd.f32 %v132, %v483
    %v485 = vpop.f32.mrb[0].mxu0
    %486 = vmatprep.mubr.bf16.mxu0 %v247
    %487 = vmatmul.mubr.bf16.gmra.mrb[0].mxu0 %v246
    %v488 = vpop.f32.mrb[0].mxu0
    %v489 = vadd.f32 %v132, %v488
    %v490 = vpop.f32.mrb[0].mxu0
    %v491 = vpop.f32.mrb[0].mxu0
    %v492 = vadd.f32 %v132, %v491
    %v493 = vpop.f32.mrb[0].mxu0
    %494 = vmatprep.mubr.bf16.mxu0 %v249
    %495 = vmatmul.mubr.bf16.gmra.mrb[0].mxu0 %v248
    %v496 = vpop.f32.mrb[0].mxu0
    %v497 = vadd.f32 %v132, %v496
    %v498 = vpop.f32.mrb[0].mxu0
    %v499 = vpop.f32.mrb[0].mxu0
    %v500 = vadd.f32 %v132, %v499
    %v501 = vpop.f32.mrb[0].mxu0
    %502 = vmatprep.mubr.bf16.mxu0 %v251
    %503 = vmatmul.mubr.bf16.gmra.mrb[0].mxu0 %v250
    %v504 = vpop.f32.mrb[0].mxu0
    %v505 = vadd.f32 %v132, %v504
    %v506 = vpop.f32.mrb[0].mxu0
    %v507 = vpop.f32.mrb[0].mxu0
    %v508 = vadd.f32 %v132, %v507
    %v509 = vpop.f32.mrb[0].mxu0
    %510 = vmatprep.mubr.bf16.mxu0 %v253
    %511 = vmatmul.mubr.bf16.gmra.mrb[0].mxu0 %v252
    %v512 = vpop.f32.mrb[0].mxu0
    %v513 = vadd.f32 %v132, %v512
    %v514 = vpop.f32.mrb[0].mxu0
    %v515 = vpop.f32.mrb[0].mxu0
    %v516 = vadd.f32 %v132, %v515
    %v517 = vpop.f32.mrb[0].mxu0
    %518 = vmatprep.mubr.bf16.mxu0 %v255
    %519 = vmatmul.mubr.bf16.gmra.mrb[0].mxu0 %v254
    %v520 = vpop.f32.mrb[0].mxu0
    %v521 = vadd.f32 %v132, %v520
    %v522 = vpop.f32.mrb[0].mxu0
    %v523 = vpop.f32.mrb[0].mxu0
    %v524 = vadd.f32 %v132, %v523
    %v525 = vpop.f32.mrb[0].mxu0
    %526 = vmatprep.mubr.bf16.mxu0 %v257
    %527 = vmatmul.mubr.bf16.gmra.mrb[0].mxu0 %v256
    %v528 = vpop.f32.mrb[0].mxu0
    %v529 = vadd.f32 %v132, %v528
    %v530 = vpop.f32.mrb[0].mxu0
    %v531 = vpop.f32.mrb[0].mxu0
    %v532 = vadd.f32 %v132, %v531
    %v533 = vpop.f32.mrb[0].mxu0
    %534 = vmatprep.mubr.bf16.mxu0 %v259
    %535 = vmatmul.mubr.bf16.gmra.mrb[0].mxu0 %v258
    %v536 = vpop.f32.mrb[0].mxu0
    %v537 = vadd.f32 %v132, %v536
    %v538 = vpop.f32.mrb[0].mxu0
    %v539 = vpop.f32.mrb[0].mxu0
    %v540 = vadd.f32 %v132, %v539
    %v541 = vpop.f32.mrb[0].mxu0
    %542 = vmatprep.mubr.bf16.mxu0 %v261
    %543 = vmatmul.mubr.bf16.gmra.mrb[0].mxu0 %v260
    %v544 = vpop.f32.mrb[0].mxu0
    %v545 = vadd.f32 %v132, %v544
    %v546 = vpop.f32.mrb[0].mxu0
    %v547 = vpop.f32.mrb[0].mxu0
    %v548 = vadd.f32 %v132, %v547
    %v549 = vpop.f32.mrb[0].mxu0
    %550 = vdwg.mxu0
    %v551 = vmax.f32 %v425, 0.0
    %v552 = vmax.f32 %v428, 0.0
    %v553 = vmax.f32 %v433, 0.0
    %v554 = vmax.f32 %v436, 0.0
    %v555 = vmax.f32 %v441, 0.0
    %v556 = vmax.f32 %v444, 0.0
    %v557 = vmax.f32 %v449, 0.0
    %v558 = vmax.f32 %v452, 0.0
    %v559 = vmax.f32 %v457, 0.0
    %v560 = vmax.f32 %v460, 0.0
    %v561 = vmax.f32 %v465, 0.0
    %v562 = vmax.f32 %v468, 0.0
    %v563 = vmax.f32 %v473, 0.0
    %v564 = vmax.f32 %v476, 0.0
    %v565 = vmax.f32 %v481, 0.0
    %v566 = vmax.f32 %v484, 0.0
    %v567 = vmax.f32 %v489, 0.0
    %v568 = vmax.f32 %v492, 0.0
    %v569 = vmax.f32 %v497, 0.0
    %v570 = vmax.f32 %v500, 0.0
    %v571 = vmax.f32 %v505, 0.0
    %v572 = vmax.f32 %v508, 0.0
    %v573 = vmax.f32 %v513, 0.0
    %v574 = vmax.f32 %v516, 0.0
    %v575 = vmax.f32 %v521, 0.0
    %v576 = vmax.f32 %v524, 0.0
    %v577 = vmax.f32 %v529, 0.0
    %v578 = vmax.f32 %v532, 0.0
    %v579 = vmax.f32 %v537, 0.0
    %v580 = vmax.f32 %v540, 0.0
    %v581 = vmax.f32 %v545, 0.0
    %v582 = vmax.f32 %v548, 0.0
    %v583 = vpack.c.bf16 %v552, %v551
    %v584 = vpack.c.bf16 %v554, %v553
    %v585 = vpack.c.bf16 %v556, %v555
    %v586 = vpack.c.bf16 %v558, %v557
    %v587 = vpack.c.bf16 %v560, %v559
    %v588 = vpack.c.bf16 %v562, %v561
    %v589 = vpack.c.bf16 %v564, %v563
    %v590 = vpack.c.bf16 %v566, %v565
    %v591 = vpack.c.bf16 %v568, %v567
    %v592 = vpack.c.bf16 %v570, %v569
    %v593 = vpack.c.bf16 %v572, %v571
    %v594 = vpack.c.bf16 %v574, %v573
    %v595 = vpack.c.bf16 %v576, %v575
    %v596 = vpack.c.bf16 %v578, %v577
    %v597 = vpack.c.bf16 %v580, %v579
    %v598 = vpack.c.bf16 %v582, %v581
    %v599 = vld [vmem:[#allocation7] sm:$0xf]
    %v600 = vld [vmem:[#allocation7 + $0x4] sm:$0xf]
    %v601 = vld [vmem:[#allocation7 + $0x8] sm:$0xf]
    %v602 = vld [vmem:[#allocation7 + $0xc] sm:$0xf]
    %v603 = vld [vmem:[#allocation7 + $0x10] sm:$0xf]
    %v604 = vld [vmem:[#allocation7 + $0x14] sm:$0xf]
    %v605 = vld [vmem:[#allocation7 + $0x18] sm:$0xf]
    %v606 = vld [vmem:[#allocation7 + $0x1c] sm:$0xf]
    %v607 = vld [vmem:[#allocation7 + $0x20] sm:$0xf]
    %v608 = vld [vmem:[#allocation7 + $0x24] sm:$0xf]
    %v609 = vld [vmem:[#allocation7 + $0x28] sm:$0xf]
    %v610 = vld [vmem:[#allocation7 + $0x2c] sm:$0xf]
    %v611 = vld [vmem:[#allocation7 + $0x30] sm:$0xf]
    %v612 = vld [vmem:[#allocation7 + $0x34] sm:$0xf]
    %v613 = vld [vmem:[#allocation7 + $0x38] sm:$0xf]
    %v614 = vld [vmem:[#allocation7 + $0x3c] sm:$0xf]
    %v615 = vld [vmem:[%s4] sm:$0x1]
    %v617 = vlaneseq
    %v618 = vshrl.u32 %v617, 7
    %v619 = vsub.s32 0, %v618
    %v620 = vrot.slane %v615, %v619
    %v638 = vunpack.c.l.b16 %v599
    %v639 = vunpack.c.l.b16 %v600
    %v640 = vunpack.c.l.b16 %v601
    %v641 = vunpack.c.l.b16 %v602
    %v642 = vunpack.c.l.b16 %v603
    %v643 = vunpack.c.l.b16 %v604
    %v644 = vunpack.c.l.b16 %v605
    %v645 = vunpack.c.l.b16 %v606
    %v646 = vunpack.c.l.b16 %v607
    %v647 = vunpack.c.l.b16 %v608
    %v648 = vunpack.c.l.b16 %v609
    %v649 = vunpack.c.l.b16 %v610
    %v650 = vunpack.c.l.b16 %v611
    %v651 = vunpack.c.l.b16 %v612
    %v652 = vunpack.c.l.b16 %v613
    %v653 = vunpack.c.l.b16 %v614
    %v654 = vpack.c.b16 %v639, %v638
    %v655 = vpack.c.b16 %v641, %v640
    %v656 = vpack.c.b16 %v643, %v642
    %v657 = vpack.c.b16 %v645, %v644
    %v658 = vpack.c.b16 %v647, %v646
    %v659 = vpack.c.b16 %v649, %v648
    %v660 = vpack.c.b16 %v651, %v650
    %v661 = vpack.c.b16 %v653, %v652
    %670 = vmatprep.subr.bf16.mxu0 0
    %671 = vmatpush1.bf16.msra.mxu0 %v654
    %672 = vmatprep.subr.bf16.mxu0 0
    %673 = vmatpush1.bf16.msra.mxu0 %v655
    %674 = vmatprep.subr.bf16.mxu0 0
    %675 = vmatpush1.bf16.msra.mxu0 %v656
    %676 = vmatprep.subr.bf16.mxu0 0
    %677 = vmatpush1.bf16.msra.mxu0 %v657
    %678 = vmatprep.subr.bf16.mxu0 0
    %679 = vmatpush1.bf16.msra.mxu0 %v658
    %680 = vmatprep.subr.bf16.mxu0 0
    %681 = vmatpush1.bf16.msra.mxu0 %v659
    %682 = vmatprep.subr.bf16.mxu0 0
    %683 = vmatpush1.bf16.msra.mxu0 %v660
    %684 = vmatprep.subr.bf16.mxu0 0
    %685 = vmatpush1.bf16.msra.mxu0 %v661
    %686 = vmatprep.subr.bf16.mxu0 0
    %687 = vmatpush1.bf16.msra.mxu0 0
    %688 = vmatprep.subr.bf16.mxu0 0
    %689 = vmatpush1.bf16.msra.mxu0 0
    %690 = vmatprep.subr.bf16.mxu0 0
    %691 = vmatpush1.bf16.msra.mxu0 0
    %692 = vmatprep.subr.bf16.mxu0 0
    %693 = vmatpush1.bf16.msra.mxu0 0
    %694 = vmatprep.subr.bf16.mxu0 0
    %695 = vmatpush1.bf16.msra.mxu0 0
    %696 = vmatprep.subr.bf16.mxu0 0
    %697 = vmatpush1.bf16.msra.mxu0 0
    %698 = vmatprep.subr.bf16.mxu0 0
    %699 = vmatpush1.bf16.msra.mxu0 0
    %700 = vmatprep.subr.bf16.mxu0 0
    %701 = vmatpush1.bf16.msra.mxu0 0
    %702 = vmatprep.mubr.bf16.mxu0 0
    %703 = vmatmul.mubr.bf16.gmra.mrb[0].mxu0 %v583
    %v704 = vpop.f32.mrb[0].mxu0
    %v705 = vadd.f32 %v620, %v704
    %v706 = vpop.f32.mrb[0].mxu0
    %v707 = vpop.f32.mrb[0].mxu0
    %v708 = vadd.f32 %v620, %v707
    %v709 = vpop.f32.mrb[0].mxu0
    %710 = vmatprep.mubr.bf16.mxu0 0
    %711 = vmatmul.mubr.bf16.gmra.mrb[0].mxu0 %v584
    %v712 = vpop.f32.mrb[0].mxu0
    %v713 = vadd.f32 %v620, %v712
    %v714 = vpop.f32.mrb[0].mxu0
    %v715 = vpop.f32.mrb[0].mxu0
    %v716 = vadd.f32 %v620, %v715
    %v717 = vpop.f32.mrb[0].mxu0
    %718 = vmatprep.mubr.bf16.mxu0 0
    %719 = vmatmul.mubr.bf16.gmra.mrb[0].mxu0 %v585
    %v720 = vpop.f32.mrb[0].mxu0
    %v721 = vadd.f32 %v620, %v720
    %v722 = vpop.f32.mrb[0].mxu0
    %v723 = vpop.f32.mrb[0].mxu0
    %v724 = vadd.f32 %v620, %v723
    %v725 = vpop.f32.mrb[0].mxu0
    %726 = vmatprep.mubr.bf16.mxu0 0
    %727 = vmatmul.mubr.bf16.gmra.mrb[0].mxu0 %v586
    %v728 = vpop.f32.mrb[0].mxu0
    %v729 = vadd.f32 %v620, %v728
    %v730 = vpop.f32.mrb[0].mxu0
    %v731 = vpop.f32.mrb[0].mxu0
    %v732 = vadd.f32 %v620, %v731
    %v733 = vpop.f32.mrb[0].mxu0
    %734 = vmatprep.mubr.bf16.mxu0 0
    %735 = vmatmul.mubr.bf16.gmra.mrb[0].mxu0 %v587
    %v736 = vpop.f32.mrb[0].mxu0
    %v737 = vadd.f32 %v620, %v736
    %v738 = vpop.f32.mrb[0].mxu0
    %v739 = vpop.f32.mrb[0].mxu0
    %v740 = vadd.f32 %v620, %v739
    %v741 = vpop.f32.mrb[0].mxu0
    %742 = vmatprep.mubr.bf16.mxu0 0
    %743 = vmatmul.mubr.bf16.gmra.mrb[0].mxu0 %v588
    %v744 = vpop.f32.mrb[0].mxu0
    %v745 = vadd.f32 %v620, %v744
    %v746 = vpop.f32.mrb[0].mxu0
    %v747 = vpop.f32.mrb[0].mxu0
    %v748 = vadd.f32 %v620, %v747
    %v749 = vpop.f32.mrb[0].mxu0
    %750 = vmatprep.mubr.bf16.mxu0 0
    %751 = vmatmul.mubr.bf16.gmra.mrb[0].mxu0 %v589
    %v752 = vpop.f32.mrb[0].mxu0
    %v753 = vadd.f32 %v620, %v752
    %v754 = vpop.f32.mrb[0].mxu0
    %v755 = vpop.f32.mrb[0].mxu0
    %v756 = vadd.f32 %v620, %v755
    %v757 = vpop.f32.mrb[0].mxu0
    %758 = vmatprep.mubr.bf16.mxu0 0
    %759 = vmatmul.mubr.bf16.gmra.mrb[0].mxu0 %v590
    %v760 = vpop.f32.mrb[0].mxu0
    %v761 = vadd.f32 %v620, %v760
    %v762 = vpop.f32.mrb[0].mxu0
    %v763 = vpop.f32.mrb[0].mxu0
    %v764 = vadd.f32 %v620, %v763
    %v765 = vpop.f32.mrb[0].mxu0
    %766 = vmatprep.mubr.bf16.mxu0 0
    %767 = vmatmul.mubr.bf16.gmra.mrb[0].mxu0 %v591
    %v768 = vpop.f32.mrb[0].mxu0
    %v769 = vadd.f32 %v620, %v768
    %v770 = vpop.f32.mrb[0].mxu0
    %v771 = vpop.f32.mrb[0].mxu0
    %v772 = vadd.f32 %v620, %v771
    %v773 = vpop.f32.mrb[0].mxu0
    %774 = vmatprep.mubr.bf16.mxu0 0
    %775 = vmatmul.mubr.bf16.gmra.mrb[0].mxu0 %v592
    %v776 = vpop.f32.mrb[0].mxu0
    %v777 = vadd.f32 %v620, %v776
    %v778 = vpop.f32.mrb[0].mxu0
    %v779 = vpop.f32.mrb[0].mxu0
    %v780 = vadd.f32 %v620, %v779
    %v781 = vpop.f32.mrb[0].mxu0
    %782 = vmatprep.mubr.bf16.mxu0 0
    %783 = vmatmul.mubr.bf16.gmra.mrb[0].mxu0 %v593
    %v784 = vpop.f32.mrb[0].mxu0
    %v785 = vadd.f32 %v620, %v784
    %v786 = vpop.f32.mrb[0].mxu0
    %v787 = vpop.f32.mrb[0].mxu0
    %v788 = vadd.f32 %v620, %v787
    %v789 = vpop.f32.mrb[0].mxu0
    %790 = vmatprep.mubr.bf16.mxu0 0
    %791 = vmatmul.mubr.bf16.gmra.mrb[0].mxu0 %v594
    %v792 = vpop.f32.mrb[0].mxu0
    %v793 = vadd.f32 %v620, %v792
    %v794 = vpop.f32.mrb[0].mxu0
    %v795 = vpop.f32.mrb[0].mxu0
    %v796 = vadd.f32 %v620, %v795
    %v797 = vpop.f32.mrb[0].mxu0
    %798 = vmatprep.mubr.bf16.mxu0 0
    %799 = vmatmul.mubr.bf16.gmra.mrb[0].mxu0 %v595
    %v800 = vpop.f32.mrb[0].mxu0
    %v801 = vadd.f32 %v620, %v800
    %v802 = vpop.f32.mrb[0].mxu0
    %v803 = vpop.f32.mrb[0].mxu0
    %v804 = vadd.f32 %v620, %v803
    %v805 = vpop.f32.mrb[0].mxu0
    %806 = vmatprep.mubr.bf16.mxu0 0
    %807 = vmatmul.mubr.bf16.gmra.mrb[0].mxu0 %v596
    %v808 = vpop.f32.mrb[0].mxu0
    %v809 = vadd.f32 %v620, %v808
    %v810 = vpop.f32.mrb[0].mxu0
    %v811 = vpop.f32.mrb[0].mxu0
    %v812 = vadd.f32 %v620, %v811
    %v813 = vpop.f32.mrb[0].mxu0
    %814 = vmatprep.mubr.bf16.mxu0 0
    %815 = vmatmul.mubr.bf16.gmra.mrb[0].mxu0 %v597
    %v816 = vpop.f32.mrb[0].mxu0
    %v817 = vadd.f32 %v620, %v816
    %v818 = vpop.f32.mrb[0].mxu0
    %v819 = vpop.f32.mrb[0].mxu0
    %v820 = vadd.f32 %v620, %v819
    %v821 = vpop.f32.mrb[0].mxu0
    %822 = vmatprep.mubr.bf16.mxu0 0
    %823 = vmatmul.mubr.bf16.gmra.mrb[0].mxu0 %v598
    %v824 = vpop.f32.mrb[0].mxu0
    %v825 = vadd.f32 %v620, %v824
    %v826 = vpop.f32.mrb[0].mxu0
    %v827 = vpop.f32.mrb[0].mxu0
    %v828 = vadd.f32 %v620, %v827
    %v829 = vpop.f32.mrb[0].mxu0
    %830 = vdwg.mxu0
    %831 = vst [vmem:[#allocation8] sm:$0xff] %v705
    %832 = vst [vmem:[#allocation8 + $0x8] sm:$0xff] %v708
    %833 = vst [vmem:[#allocation8 + $0x10] sm:$0xff] %v713
    %834 = vst [vmem:[#allocation8 + $0x18] sm:$0xff] %v716
    %835 = vst [vmem:[#allocation8 + $0x20] sm:$0xff] %v721
    %836 = vst [vmem:[#allocation8 + $0x28] sm:$0xff] %v724
    %837 = vst [vmem:[#allocation8 + $0x30] sm:$0xff] %v729
    %838 = vst [vmem:[#allocation8 + $0x38] sm:$0xff] %v732
    %839 = vst [vmem:[#allocation8 + $0x40] sm:$0xff] %v737
    %840 = vst [vmem:[#allocation8 + $0x48] sm:$0xff] %v740
    %841 = vst [vmem:[#allocation8 + $0x50] sm:$0xff] %v745
    %842 = vst [vmem:[#allocation8 + $0x58] sm:$0xff] %v748
    %843 = vst [vmem:[#allocation8 + $0x60] sm:$0xff] %v753
    %844 = vst [vmem:[#allocation8 + $0x68] sm:$0xff] %v756
    %845 = vst [vmem:[#allocation8 + $0x70] sm:$0xff] %v761
    %846 = vst [vmem:[#allocation8 + $0x78] sm:$0xff] %v764
    %847 = vst [vmem:[#allocation8 + $0x80] sm:$0xff] %v769
    %848 = vst [vmem:[#allocation8 + $0x88] sm:$0xff] %v772
    %849 = vst [vmem:[#allocation8 + $0x90] sm:$0xff] %v777
    %850 = vst [vmem:[#allocation8 + $0x98] sm:$0xff] %v780
    %851 = vst [vmem:[#allocation8 + $0xa0] sm:$0xff] %v785
    %852 = vst [vmem:[#allocation8 + $0xa8] sm:$0xff] %v788
    %853 = vst [vmem:[#allocation8 + $0xb0] sm:$0xff] %v793
    %854 = vst [vmem:[#allocation8 + $0xb8] sm:$0xff] %v796
    %855 = vst [vmem:[#allocation8 + $0xc0] sm:$0xff] %v801
    %856 = vst [vmem:[#allocation8 + $0xc8] sm:$0xff] %v804
    %857 = vst [vmem:[#allocation8 + $0xd0] sm:$0xff] %v809
    %858 = vst [vmem:[#allocation8 + $0xd8] sm:$0xff] %v812
    %859 = vst [vmem:[#allocation8 + $0xe0] sm:$0xff] %v817
    %860 = vst [vmem:[#allocation8 + $0xe8] sm:$0xff] %v820
    %861 = vst [vmem:[#allocation8 + $0xf0] sm:$0xff] %v825
    %862 = vst [vmem:[#allocation8 + $0xf8] sm:$0xff] %v828
    // Predicated region
    $region34: #{tpu_custom_call.1} parent=1 // pred_check
      _
    $region35: #{tpu_custom_call.1} parent=1 // pred_check_branch
      %864 = sbr.rel (0) target = $region37
    $region36: #{tpu_custom_call.1} parent=1 // pred_region
      %s866 = ssub.s32 4096, 4096
      %867 = vsyncadd [#allocation4], %s866
      %s868 = sshll.u32 [#allocation8], 4
      %s869 = int_to_ptr.vmem [resolvable:$true] %s868
      %874 = dma.vmem_to_hbm [thread:$0]  %s869, 4096, %s5, [#allocation4], 128, 128, 8
    $region37: #{tpu_custom_call.1} parent=1 // pred_fallthru
      _
    // Predicated region
    $region38: #{tpu_custom_call.1} parent=1 // pred_check
      _
    $region39: #{tpu_custom_call.1} parent=1 // pred_check_branch
      %876 = sbr.rel (0) target = $region41
    $region40: #{tpu_custom_call.1} parent=1 // pred_region
      %877 = dma.done [#allocation4], 4096
    $region41: #{tpu_custom_call.1} parent=1 // pred_fallthru
      _
    %878 = vsyncpa [#allocation3], 1
    %879 = vsyncpa [#allocation6], 1
    %880 = vsyncpa [#allocation4], 1

</llo_original>
